<compile_context>
chip_gen: v6e
topology: v6e:2x2x1
jax: 0.10.0
libtpu: 0.0.40
codegen_flags: <defaults>
</compile_context>

<pallas_src>
import jax
import jax.numpy as jnp
from jax.experimental import pallas as pl
from jax.experimental.pallas import tpu as pltpu


K_PAD = 896  # 784 padded up to 7 * 128


def _round_up(n, m):
    return ((n + m - 1) // m) * m


def encoder_kernel(
    x_ref,                 # (TM, 896)  bf16
    w1_ref, b1_ref,        # (896, 512) bf16, (1, 512) f32
    w2_ref, b2_ref,        # (512, 128) bf16, (1, 128) f32
    w3_ref, b3_ref,        # (128, 64)  bf16, (1, 64)  f32
    wh_ref, bh_ref,        # (64, Nout) bf16, (1, Nout) f32   (fused mean|logvar heads)
    out_ref,               # (TM, Nout) f32
):
    x = x_ref[...]

    # Layer 1: bf16 MXU matmul, f32 accumulate / bias / ReLU, bf16 re-cast for next matmul.
    h = jnp.dot(x, w1_ref[...], preferred_element_type=jnp.float32) + b1_ref[...]
    h = jnp.maximum(h, 0.0).astype(jnp.bfloat16)

    # Layer 2
    h = jnp.dot(h, w2_ref[...], preferred_element_type=jnp.float32) + b2_ref[...]
    h = jnp.maximum(h, 0.0).astype(jnp.bfloat16)

    # Layer 3
    h = jnp.dot(h, w3_ref[...], preferred_element_type=jnp.float32) + b3_ref[...]
    h = jnp.maximum(h, 0.0).astype(jnp.bfloat16)

    # Fused heads: one matmul, one lane-dense (TM, 128) store.
    out_ref[...] = (
        jnp.dot(h, wh_ref[...], preferred_element_type=jnp.float32) + bh_ref[...]
    )


def encoder_forward(x_nchw, params):
    """x_nchw: (B, 1, 28, 28) float32  ->  (mean, logvar), each (B, latent_dim)."""
    B = x_nchw.shape[0]
    x = x_nchw.reshape(B, 28 * 28).astype(jnp.float32)   # matches torch x.view(-1, 784)
    x = jnp.pad(x, ((0, 0), (0, K_PAD - 784)))            # lane-align K: 784 -> 896

    (w1, b1), (w2, b2), (w3, b3), (wm, bm), (wl, bl) = params
    L = wm.shape[1]

    # Fuse mean/logvar heads into a single (64, 2L) matmul, pad columns to >= 128
    # so the output store is lane-dense.
    wh = jnp.concatenate([wm, wl], axis=1)                # (64, 2L)
    bh = jnp.concatenate([bm, bl], axis=1)                # (1, 2L)
    n_out = max(128, _round_up(2 * L, 128))
    wh = jnp.pad(wh, ((0, 0), (0, n_out - 2 * L)))
    bh = jnp.pad(bh, ((0, 0), (0, n_out - 2 * L)))

    # Zero-pad W1 rows to match the padded K (extra rows contribute 0).
    w1p = jnp.pad(w1, ((0, K_PAD - 784), (0, 0)))

    # bf16 weights & input (MXU / HBM bandwidth); biases stay f32 for the f32 accumulator.
    w1p = w1p.astype(jnp.bfloat16)
    w2b = w2.astype(jnp.bfloat16)
    w3b = w3.astype(jnp.bfloat16)
    whb = wh.astype(jnp.bfloat16)
    x_bf = x.astype(jnp.bfloat16)

    # Batch tiling: big batches use TM=256 (good MXU row utilization, DMA/compute
    # overlap across grid steps); small batches are padded to one full tile.
    if B >= 256:
        TM = 256
    else:
        TM = max(16, _round_up(B, 16))
    B_pad = _round_up(B, TM)
    if B_pad != B:
        x_bf = jnp.pad(x_bf, ((0, B_pad - B), (0, 0)))
    grid = (B_pad // TM,)

    def resident(arr):
        # Constant index_map: block never changes -> stays VMEM-resident across grid steps.
        shape = arr.shape
        return pl.BlockSpec(shape, lambda i: tuple(0 for _ in shape))

    out = pl.pallas_call(
        encoder_kernel,
        out_shape=jax.ShapeDtypeStruct((B_pad, n_out), jnp.float32),
        grid=grid,
        in_specs=[
            pl.BlockSpec((TM, K_PAD), lambda i: (i, 0)),   # x: blocked on batch
            resident(w1p), resident(b1),
            resident(w2b), resident(b2),
            resident(w3b), resident(b3),
            resident(whb), resident(bh),
        ],
        out_specs=pl.BlockSpec((TM, n_out), lambda i: (i, 0)),
        compiler_params=pltpu.CompilerParams(
            dimension_semantics=("parallel",),     # shard batch tiles across TCs on v7x
            vmem_limit_bytes=16 << 20,
        ),
    )(x_bf, w1p, b1, w2b, b2, w3b, b3, whb, bh)

    mean = out[:B, :L]
    logvar = out[:B, L:2 * L]
    return mean, logvar


def init_params(key, latent_dim):
    """Deterministic init mimicking nn.Linear default (uniform ±1/sqrt(fan_in)).
    Weights are stored transposed relative to PyTorch, as (in_features, out_features)."""
    dims = [(784, 512), (512, 128), (128, 64), (64, latent_dim), (64, latent_dim)]
    params = []
    for (fan_in, fan_out) in dims:
        key, kw, kb = jax.random.split(key, 3)
        bound = 1.0 / jnp.sqrt(fan_in)
        w = jax.random.uniform(kw, (fan_in, fan_out), jnp.float32, -bound, bound)
        b = jax.random.uniform(kb, (1, fan_out), jnp.float32, -bound, bound)
        params.append((w, b))
    return params


def reference_forward_bf16(x_nchw, params):
    """Pure-JAX reference mirroring the kernel's bf16 weight/activation precision."""
    x = x_nchw.reshape(x_nchw.shape[0], 784).astype(jnp.bfloat16)
    (w1, b1), (w2, b2), (w3, b3), (wm, bm), (wl, bl) = params

    def layer(h, w, b, relu=True):
        y = jnp.dot(h, w.astype(jnp.bfloat16), preferred_element_type=jnp.float32) + b
        if relu:
            y = jnp.maximum(y, 0.0).astype(jnp.bfloat16)
        return y

    h = layer(x, w1, b1)
    h = layer(h, w2, b2)
    h = layer(h, w3, b3)
    return layer(h, wm, bm, relu=False), layer(h, wl, bl, relu=False)


def reference_forward_f32(x_nchw, params):
    """Full-precision reference of the original module semantics."""
    x = x_nchw.reshape(x_nchw.shape[0], 784)
    (w1, b1), (w2, b2), (w3, b3), (wm, bm), (wl, bl) = params
    h = jnp.maximum(x @ w1 + b1, 0.0)
    h = jnp.maximum(h @ w2 + b2, 0.0)
    h = jnp.maximum(h @ w3 + b3, 0.0)
    return h @ wm + bm, h @ wl + bl


if __name__ == "__main__":
    key = jax.random.PRNGKey(0)
    k_x, k_p = jax.random.split(key)

    B = 8
    latent_dim = 16
    x = jax.random.normal(k_x, (B, 1, 28, 28), jnp.float32)  # NCHW like PyTorch
    params = init_params(k_p, latent_dim)

    mean, logvar = jax.block_until_ready(encoder_forward(x, params))

    assert mean.shape == (B, latent_dim) and logvar.shape == (B, latent_dim)

    # Tight check against a reference mirroring the kernel's bf16 precision.
    ref_mean_bf, ref_logvar_bf = reference_forward_bf16(x, params)
    assert jnp.allclose(mean, ref_mean_bf, atol=1e-2, rtol=1e-2)
    assert jnp.allclose(logvar, ref_logvar_bf, atol=1e-2, rtol=1e-2)

    # Loose sanity check against the full-f32 module semantics.
    ref_mean, ref_logvar = reference_forward_f32(x, params)
    assert jnp.allclose(mean, ref_mean, atol=1e-1, rtol=1e-1)
    assert jnp.allclose(logvar, ref_logvar, atol=1e-1, rtol=1e-1)

    print("KERNEL_OK")
</pallas_src>

<mosaic_0001>
module attributes {stable_mosaic.version = 11 : i64} {
  func.func @encoder_kernel(%arg0: i32, %arg1: memref<16x896xbf16, #tpu.memory_space<vmem>>, %arg2: memref<896x512xbf16, #tpu.memory_space<vmem>>, %arg3: memref<1x512xf32, #tpu.memory_space<vmem>>, %arg4: memref<512x128xbf16, #tpu.memory_space<vmem>>, %arg5: memref<1x128xf32, #tpu.memory_space<vmem>>, %arg6: memref<128x64xbf16, #tpu.memory_space<vmem>>, %arg7: memref<1x64xf32, #tpu.memory_space<vmem>>, %arg8: memref<64x128xbf16, #tpu.memory_space<vmem>>, %arg9: memref<1x128xf32, #tpu.memory_space<vmem>>, %arg10: memref<16x128xf32, #tpu.memory_space<vmem>>) attributes {dimension_semantics = [#tpu.dimension_semantics<parallel>], iteration_bounds = array<i64: 1>, scalar_prefetch = 0 : i64, scratch_operands = 0 : i64, tpu.core_type = #tpu.core_type<tc>, window_params = [{transform_indices = @transform_0, window_bounds = array<i64: 16, 896>}, {pipeline_mode = #tpu.pipeline_mode<synchronous>, transform_indices = @transform_1, window_bounds = array<i64: 896, 512>}, {pipeline_mode = #tpu.pipeline_mode<synchronous>, transform_indices = @transform_2, window_bounds = array<i64: 1, 512>}, {pipeline_mode = #tpu.pipeline_mode<synchronous>, transform_indices = @transform_3, window_bounds = array<i64: 512, 128>}, {pipeline_mode = #tpu.pipeline_mode<synchronous>, transform_indices = @transform_4, window_bounds = array<i64: 1, 128>}, {pipeline_mode = #tpu.pipeline_mode<synchronous>, transform_indices = @transform_5, window_bounds = array<i64: 128, 64>}, {pipeline_mode = #tpu.pipeline_mode<synchronous>, transform_indices = @transform_6, window_bounds = array<i64: 1, 64>}, {pipeline_mode = #tpu.pipeline_mode<synchronous>, transform_indices = @transform_7, window_bounds = array<i64: 64, 128>}, {pipeline_mode = #tpu.pipeline_mode<synchronous>, transform_indices = @transform_8, window_bounds = array<i64: 1, 128>}, {transform_indices = @transform_9, window_bounds = array<i64: 16, 128>}]} {
    %c0 = arith.constant 0 : index
    %c0_0 = arith.constant 0 : index
    %0 = vector.load %arg1[%c0, %c0_0] : memref<16x896xbf16, #tpu.memory_space<vmem>>, vector<16x896xbf16>
    %c0_1 = arith.constant 0 : index
    %c0_2 = arith.constant 0 : index
    %1 = vector.load %arg2[%c0_1, %c0_2] : memref<896x512xbf16, #tpu.memory_space<vmem>>, vector<896x512xbf16>
    %cst = arith.constant dense<0.000000e+00> : vector<16x512xf32>
    %2 = tpu.matmul %0, %1, %cst {dimension_numbers = #tpu.dot_dimension_numbers<[1], [0], [0], [1], [0, 0, 1, 1], [], []>} : vector<16x896xbf16>, vector<896x512xbf16>, vector<16x512xf32> -> vector<16x512xf32>
    %c0_3 = arith.constant 0 : index
    %c0_4 = arith.constant 0 : index
    %3 = vector.load %arg3[%c0_3, %c0_4] : memref<1x512xf32, #tpu.memory_space<vmem>>, vector<1x512xf32>
    %4 = vector.broadcast %3 : vector<1x512xf32> to vector<16x512xf32>
    %5 = arith.addf %2, %4 : vector<16x512xf32>
    %cst_5 = arith.constant 0.000000e+00 : f32
    %6 = vector.broadcast %cst_5 : f32 to vector<16x512xf32>
    %7 = arith.maximumf %5, %6 : vector<16x512xf32>
    %8 = arith.truncf %7 : vector<16x512xf32> to vector<16x512xbf16>
    %c0_6 = arith.constant 0 : index
    %c0_7 = arith.constant 0 : index
    %9 = vector.load %arg4[%c0_6, %c0_7] : memref<512x128xbf16, #tpu.memory_space<vmem>>, vector<512x128xbf16>
    %cst_8 = arith.constant dense<0.000000e+00> : vector<16x128xf32>
    %10 = tpu.matmul %8, %9, %cst_8 {dimension_numbers = #tpu.dot_dimension_numbers<[1], [0], [0], [1], [0, 0, 1, 1], [], []>} : vector<16x512xbf16>, vector<512x128xbf16>, vector<16x128xf32> -> vector<16x128xf32>
    %c0_9 = arith.constant 0 : index
    %c0_10 = arith.constant 0 : index
    %11 = vector.load %arg5[%c0_9, %c0_10] : memref<1x128xf32, #tpu.memory_space<vmem>>, vector<1x128xf32>
    %12 = vector.broadcast %11 : vector<1x128xf32> to vector<16x128xf32>
    %13 = arith.addf %10, %12 : vector<16x128xf32>
    %cst_11 = arith.constant 0.000000e+00 : f32
    %14 = vector.broadcast %cst_11 : f32 to vector<16x128xf32>
    %15 = arith.maximumf %13, %14 : vector<16x128xf32>
    %16 = arith.truncf %15 : vector<16x128xf32> to vector<16x128xbf16>
    %c0_12 = arith.constant 0 : index
    %c0_13 = arith.constant 0 : index
    %17 = vector.load %arg6[%c0_12, %c0_13] : memref<128x64xbf16, #tpu.memory_space<vmem>>, vector<128x64xbf16>
    %cst_14 = arith.constant dense<0.000000e+00> : vector<16x64xf32>
    %18 = tpu.matmul %16, %17, %cst_14 {dimension_numbers = #tpu.dot_dimension_numbers<[1], [0], [0], [1], [0, 0, 1, 1], [], []>} : vector<16x128xbf16>, vector<128x64xbf16>, vector<16x64xf32> -> vector<16x64xf32>
    %c0_15 = arith.constant 0 : index
    %c0_16 = arith.constant 0 : index
    %19 = vector.load %arg7[%c0_15, %c0_16] : memref<1x64xf32, #tpu.memory_space<vmem>>, vector<1x64xf32>
    %20 = vector.broadcast %19 : vector<1x64xf32> to vector<16x64xf32>
    %21 = arith.addf %18, %20 : vector<16x64xf32>
    %cst_17 = arith.constant 0.000000e+00 : f32
    %22 = vector.broadcast %cst_17 : f32 to vector<16x64xf32>
    %23 = arith.maximumf %21, %22 : vector<16x64xf32>
    %24 = arith.truncf %23 : vector<16x64xf32> to vector<16x64xbf16>
    %c0_18 = arith.constant 0 : index
    %c0_19 = arith.constant 0 : index
    %25 = vector.load %arg8[%c0_18, %c0_19] : memref<64x128xbf16, #tpu.memory_space<vmem>>, vector<64x128xbf16>
    %cst_20 = arith.constant dense<0.000000e+00> : vector<16x128xf32>
    %26 = tpu.matmul %24, %25, %cst_20 {dimension_numbers = #tpu.dot_dimension_numbers<[1], [0], [0], [1], [0, 0, 1, 1], [], []>} : vector<16x64xbf16>, vector<64x128xbf16>, vector<16x128xf32> -> vector<16x128xf32>
    %c0_21 = arith.constant 0 : index
    %c0_22 = arith.constant 0 : index
    %27 = vector.load %arg9[%c0_21, %c0_22] : memref<1x128xf32, #tpu.memory_space<vmem>>, vector<1x128xf32>
    %28 = vector.broadcast %27 : vector<1x128xf32> to vector<16x128xf32>
    %29 = arith.addf %26, %28 : vector<16x128xf32>
    %c0_23 = arith.constant 0 : index
    %c0_24 = arith.constant 0 : index
    %30 = vector.load %arg10[%c0_23, %c0_24] : memref<16x128xf32, #tpu.memory_space<vmem>>, vector<16x128xf32>
    tpu.vector_store %arg10[%c0_23, %c0_24], %29 {strides = array<i32>} : memref<16x128xf32, #tpu.memory_space<vmem>>, vector<16x128xf32>,
    return
  }
  func.func @transform_0(%arg0: i32) -> (i32, i32) {
    %c0_i32 = arith.constant 0 : i32
    %c0_i32_0 = arith.constant 0 : i32
    return %arg0, %c0_i32 : i32, i32
  }
  func.func @transform_1(%arg0: i32) -> (i32, i32) {
    %c0_i32 = arith.constant 0 : i32
    %c0_i32_0 = arith.constant 0 : i32
    %c0_i32_1 = arith.constant 0 : i32
    return %c0_i32, %c0_i32_0 : i32, i32
  }
  func.func @transform_2(%arg0: i32) -> (i32, i32) {
    %c0_i32 = arith.constant 0 : i32
    %c0_i32_0 = arith.constant 0 : i32
    %c0_i32_1 = arith.constant 0 : i32
    return %c0_i32, %c0_i32_0 : i32, i32
  }
  func.func @transform_3(%arg0: i32) -> (i32, i32) {
    %c0_i32 = arith.constant 0 : i32
    %c0_i32_0 = arith.constant 0 : i32
    %c0_i32_1 = arith.constant 0 : i32
    return %c0_i32, %c0_i32_0 : i32, i32
  }
  func.func @transform_4(%arg0: i32) -> (i32, i32) {
    %c0_i32 = arith.constant 0 : i32
    %c0_i32_0 = arith.constant 0 : i32
    %c0_i32_1 = arith.constant 0 : i32
    return %c0_i32, %c0_i32_0 : i32, i32
  }
  func.func @transform_5(%arg0: i32) -> (i32, i32) {
    %c0_i32 = arith.constant 0 : i32
    %c0_i32_0 = arith.constant 0 : i32
    %c0_i32_1 = arith.constant 0 : i32
    return %c0_i32, %c0_i32_0 : i32, i32
  }
  func.func @transform_6(%arg0: i32) -> (i32, i32) {
    %c0_i32 = arith.constant 0 : i32
    %c0_i32_0 = arith.constant 0 : i32
    %c0_i32_1 = arith.constant 0 : i32
    return %c0_i32, %c0_i32_0 : i32, i32
  }
  func.func @transform_7(%arg0: i32) -> (i32, i32) {
    %c0_i32 = arith.constant 0 : i32
    %c0_i32_0 = arith.constant 0 : i32
    %c0_i32_1 = arith.constant 0 : i32
    return %c0_i32, %c0_i32_0 : i32, i32
  }
  func.func @transform_8(%arg0: i32) -> (i32, i32) {
    %c0_i32 = arith.constant 0 : i32
    %c0_i32_0 = arith.constant 0 : i32
    %c0_i32_1 = arith.constant 0 : i32
    return %c0_i32, %c0_i32_0 : i32, i32
  }
  func.func @transform_9(%arg0: i32) -> (i32, i32) {
    %c0_i32 = arith.constant 0 : i32
    %c0_i32_0 = arith.constant 0 : i32
    return %arg0, %c0_i32 : i32, i32
  }
}

</mosaic_0001>

<llo_original>
// kernel: tpu_custom_call.1
$region0: #{tpu_custom_call.1}
  #allocation0 [shape = 'u32[]', space=smem, size = 0x4, offset = 0x4, fixed_abs, tag = 'smem constant byte address 0x4 - core index']
  #allocation1 [shape = 'u32[144,128]{1,0:T(1,128)}', space=vmem, size = 0x12000, scoped, tag = 'internal scratch']
  %s0 = inlined_call_operand.vmem [shape: bf16[16,896], index: 0, kind: input, shape index: {}]
  %s1 = inlined_call_operand.hbm [shape: bf16[896,512], index: 1, kind: input, shape index: {}]
  %s2 = inlined_call_operand.vmem [shape: f32[1,512], index: 2, kind: input, shape index: {}]
  %s3 = inlined_call_operand.hbm [shape: bf16[512,128], index: 3, kind: input, shape index: {}]
  %s4 = inlined_call_operand.vmem [shape: f32[1,128], index: 4, kind: input, shape index: {}]
  %s5 = inlined_call_operand.vmem [shape: bf16[128,64], index: 5, kind: input, shape index: {}]
  %s6 = inlined_call_operand.vmem [shape: f32[1,64], index: 6, kind: input, shape index: {}]
  %s7 = inlined_call_operand.vmem [shape: bf16[64,128], index: 7, kind: input, shape index: {}]
  %s8 = inlined_call_operand.vmem [shape: f32[1,128], index: 8, kind: input, shape index: {}]
  %s9 = inlined_call_operand.hbm [shape: f32[16,128], index: 9, kind: output, shape index: {}]
  %s10 = sld [smem:[#allocation0]]
  $region54: #{tpu_custom_call.1} parent=0
    _
  %s12 = ssub.s32 1, %s10
  %s13 = scalar_select 0, %s12, %s10
  $region1: #{tpu_custom_call.1} parent=0
    #allocation2 [shape = 'u8[917504]{0}', space=vmem, size = 0xe0000, scoped, tag = 'input window, operand 1, single buffered']
    #allocation3 [shape = 's32[1]{0}', space=sflag, size = 0x4, scoped, tag = 'scoped memory for tpu_custom_call.1']
    #allocation4 [shape = 's32[1]{0}', space=sflag, size = 0x4, scoped, tag = 'scoped memory for tpu_custom_call.1']
    #allocation5 [shape = 'u8[131072]{0}', space=vmem, size = 0x20000, scoped, tag = 'input window, operand 3, single buffered']
    #allocation6 [shape = 's32[1]{0}', space=sflag, size = 0x4, scoped, tag = 'scoped memory for tpu_custom_call.1']
    #allocation7 [shape = 'u8[8192]{0}', space=vmem, size = 0x2000, scoped, tag = 'output window, operand 0, single buffered']
    %14 = vsyncpa [#allocation3], 0
    %15 = vsyncpa [#allocation6], 0
    %16 = vsyncpa [#allocation4], 0
    // Predicated region
    $region2: #{tpu_custom_call.1} parent=1 // pred_check
      _
    $region3: #{tpu_custom_call.1} parent=1 // pred_check_branch
      %18 = sbr.rel (0) target = $region5
    $region4: #{tpu_custom_call.1} parent=1 // pred_region
      _
    $region5: #{tpu_custom_call.1} parent=1 // pred_fallthru
      _
    // Predicated region
    $region6: #{tpu_custom_call.1} parent=1 // pred_check
      _
    $region7: #{tpu_custom_call.1} parent=1 // pred_check_branch
      %20 = sbr.rel (0) target = $region9
    $region8: #{tpu_custom_call.1} parent=1 // pred_region
      %s22 = ssub.s32 28672, 28672
      %23 = vsyncadd [#allocation3], %s22
      %s24 = sshll.u32 [#allocation2], 4
      %s25 = int_to_ptr.vmem [resolvable:$true] %s24
      %30 = dma.hbm_to_vmem [thread:$0]  %s1, 28672, %s25, [#allocation3], 256, 256, 16
    $region9: #{tpu_custom_call.1} parent=1 // pred_fallthru
      _
    // Predicated region
    $region10: #{tpu_custom_call.1} parent=1 // pred_check
      _
    $region11: #{tpu_custom_call.1} parent=1 // pred_check_branch
      %32 = sbr.rel (0) target = $region13
    $region12: #{tpu_custom_call.1} parent=1 // pred_region
      _
    $region13: #{tpu_custom_call.1} parent=1 // pred_fallthru
      _
    // Predicated region
    $region14: #{tpu_custom_call.1} parent=1 // pred_check
      _
    $region15: #{tpu_custom_call.1} parent=1 // pred_check_branch
      %34 = sbr.rel (0) target = $region17
    $region16: #{tpu_custom_call.1} parent=1 // pred_region
      %s36 = ssub.s32 4096, 4096
      %37 = vsyncadd [#allocation6], %s36
      %s38 = sshll.u32 [#allocation5], 4
      %s39 = int_to_ptr.vmem [resolvable:$true] %s38
      %44 = dma.hbm_to_vmem [thread:$0]  %s3, 4096, %s39, [#allocation6], 64, 64, 4
    $region17: #{tpu_custom_call.1} parent=1 // pred_fallthru
      _
    // Predicated region
    $region18: #{tpu_custom_call.1} parent=1 // pred_check
      _
    $region19: #{tpu_custom_call.1} parent=1 // pred_check_branch
      %46 = sbr.rel (0) target = $region21
    $region20: #{tpu_custom_call.1} parent=1 // pred_region
      _
    $region21: #{tpu_custom_call.1} parent=1 // pred_fallthru
      _
    // Predicated region
    $region22: #{tpu_custom_call.1} parent=1 // pred_check
      _
    $region23: #{tpu_custom_call.1} parent=1 // pred_check_branch
      %48 = sbr.rel (0) target = $region25
    $region24: #{tpu_custom_call.1} parent=1 // pred_region
      _
    $region25: #{tpu_custom_call.1} parent=1 // pred_fallthru
      _
    // Predicated region
    $region26: #{tpu_custom_call.1} parent=1 // pred_check
      _
    $region27: #{tpu_custom_call.1} parent=1 // pred_check_branch
      %50 = sbr.rel (0) target = $region29
    $region28: #{tpu_custom_call.1} parent=1 // pred_region
      _
    $region29: #{tpu_custom_call.1} parent=1 // pred_fallthru
      _
    // Predicated region
    $region30: #{tpu_custom_call.1} parent=1 // pred_check
      _
    $region31: #{tpu_custom_call.1} parent=1 // pred_check_branch
      %52 = sbr.rel (0) target = $region33
    $region32: #{tpu_custom_call.1} parent=1 // pred_region
      _
    $region33: #{tpu_custom_call.1} parent=1 // pred_fallthru
      _
    // Predicated region
    $region34: #{tpu_custom_call.1} parent=1 // pred_check
      _
    $region35: #{tpu_custom_call.1} parent=1 // pred_check_branch
      %54 = sbr.rel (0) target = $region37
    $region36: #{tpu_custom_call.1} parent=1 // pred_region
      _
    $region37: #{tpu_custom_call.1} parent=1 // pred_fallthru
      _
    // Predicated region
    $region38: #{tpu_custom_call.1} parent=1 // pred_check
      _
    $region39: #{tpu_custom_call.1} parent=1 // pred_check_branch
      %56 = sbr.rel (0) target = $region41
    $region40: #{tpu_custom_call.1} parent=1 // pred_region
      %57 = dma.done [#allocation3], 28672
    $region41: #{tpu_custom_call.1} parent=1 // pred_fallthru
      _
    // Predicated region
    $region42: #{tpu_custom_call.1} parent=1 // pred_check
      _
    $region43: #{tpu_custom_call.1} parent=1 // pred_check_branch
      %59 = sbr.rel (0) target = $region45
    $region44: #{tpu_custom_call.1} parent=1 // pred_region
      %60 = dma.done [#allocation6], 4096
    $region45: #{tpu_custom_call.1} parent=1 // pred_fallthru
      _
    %v62 = vld [vmem:[%s0] sm:$0xff]
    %v63 = vld [vmem:[%s0 + $0x8] sm:$0xff]
    %v64 = vld [vmem:[%s0 + $0x10] sm:$0xff]
    %v65 = vld [vmem:[%s0 + $0x18] sm:$0xf]
    %v66 = vld [vmem:[%s0 + $0x1c] sm:$0xff]
    %v67 = vld [vmem:[%s0 + $0x24] sm:$0xff]
    %v68 = vld [vmem:[%s0 + $0x2c] sm:$0xff]
    %v69 = vld [vmem:[%s0 + $0x34] sm:$0xf]
    %v70 = vld [vmem:[#allocation2] sm:$0xff]
    %v71 = vld [vmem:[#allocation2 + $0x8] sm:$0xff]
    %v72 = vld [vmem:[#allocation2 + $0x10] sm:$0xff]
    %v73 = vld [vmem:[#allocation2 + $0x18] sm:$0xff]
    %v74 = vld [vmem:[#allocation2 + $0x20] sm:$0xff]
    %v75 = vld [vmem:[#allocation2 + $0x28] sm:$0xff]
    %v76 = vld [vmem:[#allocation2 + $0x30] sm:$0xff]
    %v77 = vld [vmem:[#allocation2 + $0x38] sm:$0xff]
    %v78 = vld [vmem:[#allocation2 + $0x40] sm:$0xff]
    %v79 = vld [vmem:[#allocation2 + $0x48] sm:$0xff]
    %v80 = vld [vmem:[#allocation2 + $0x50] sm:$0xff]
    %v81 = vld [vmem:[#allocation2 + $0x58] sm:$0xff]
    %v82 = vld [vmem:[#allocation2 + $0x60] sm:$0xff]
    %v83 = vld [vmem:[#allocation2 + $0x68] sm:$0xff]
    %v84 = vld [vmem:[#allocation2 + $0x70] sm:$0xff]
    %v85 = vld [vmem:[#allocation2 + $0x78] sm:$0xff]
    %v86 = vld [vmem:[#allocation2 + $0x80] sm:$0xff]
    %v87 = vld [vmem:[#allocation2 + $0x88] sm:$0xff]
    %v88 = vld [vmem:[#allocation2 + $0x90] sm:$0xff]
    %v89 = vld [vmem:[#allocation2 + $0x98] sm:$0xff]
    %v90 = vld [vmem:[#allocation2 + $0xa0] sm:$0xff]
    %v91 = vld [vmem:[#allocation2 + $0xa8] sm:$0xff]
    %v92 = vld [vmem:[#allocation2 + $0xb0] sm:$0xff]
    %v93 = vld [vmem:[#allocation2 + $0xb8] sm:$0xff]
    %v94 = vld [vmem:[#allocation2 + $0xc0] sm:$0xff]
    %v95 = vld [vmem:[#allocation2 + $0xc8] sm:$0xff]
    %v96 = vld [vmem:[#allocation2 + $0xd0] sm:$0xff]
    %v97 = vld [vmem:[#allocation2 + $0xd8] sm:$0xff]
    %v98 = vld [vmem:[#allocation2 + $0xe0] sm:$0xff]
    %v99 = vld [vmem:[#allocation2 + $0xe8] sm:$0xff]
    %v100 = vld [vmem:[#allocation2 + $0xf0] sm:$0xff]
    %v101 = vld [vmem:[#allocation2 + $0xf8] sm:$0xff]
    %v102 = vld [vmem:[#allocation2 + $0x100] sm:$0xff]
    %v103 = vld [vmem:[#allocation2 + $0x108] sm:$0xff]
    %v104 = vld [vmem:[#allocation2 + $0x110] sm:$0xff]
    %v105 = vld [vmem:[#allocation2 + $0x118] sm:$0xff]
    %v106 = vld [vmem:[#allocation2 + $0x120] sm:$0xff]
    %v107 = vld [vmem:[#allocation2 + $0x128] sm:$0xff]
    %v108 = vld [vmem:[#allocation2 + $0x130] sm:$0xff]
    %v109 = vld [vmem:[#allocation2 + $0x138] sm:$0xff]
    %v110 = vld [vmem:[#allocation2 + $0x140] sm:$0xff]
    %v111 = vld [vmem:[#allocation2 + $0x148] sm:$0xff]
    %v112 = vld [vmem:[#allocation2 + $0x150] sm:$0xff]
    %v113 = vld [vmem:[#allocation2 + $0x158] sm:$0xff]
    %v114 = vld [vmem:[#allocation2 + $0x160] sm:$0xff]
    %v115 = vld [vmem:[#allocation2 + $0x168] sm:$0xff]
    %v116 = vld [vmem:[#allocation2 + $0x170] sm:$0xff]
    %v117 = vld [vmem:[#allocation2 + $0x178] sm:$0xff]
    %v118 = vld [vmem:[#allocation2 + $0x180] sm:$0xff]
    %v119 = vld [vmem:[#allocation2 + $0x188] sm:$0xff]
    %v120 = vld [vmem:[#allocation2 + $0x190] sm:$0xff]
    %v121 = vld [vmem:[#allocation2 + $0x198] sm:$0xff]
    %v122 = vld [vmem:[#allocation2 + $0x1a0] sm:$0xff]
    %v123 = vld [vmem:[#allocation2 + $0x1a8] sm:$0xff]
    %v124 = vld [vmem:[#allocation2 + $0x1b0] sm:$0xff]
    %v125 = vld [vmem:[#allocation2 + $0x1b8] sm:$0xff]
    %v126 = vld [vmem:[#allocation2 + $0x1c0] sm:$0xff]
    %v127 = vld [vmem:[#allocation2 + $0x1c8] sm:$0xff]
    %v128 = vld [vmem:[#allocation2 + $0x1d0] sm:$0xff]
    %v129 = vld [vmem:[#allocation2 + $0x1d8] sm:$0xff]
    %v130 = vld [vmem:[#allocation2 + $0x1e0] sm:$0xff]
    %v131 = vld [vmem:[#allocation2 + $0x1e8] sm:$0xff]
    %v132 = vld [vmem:[#allocation2 + $0x1f0] sm:$0xff]
    %v133 = vld [vmem:[#allocation2 + $0x1f8] sm:$0xff]
    %v134 = vld [vmem:[#allocation2 + $0x200] sm:$0xff]
    %v135 = vld [vmem:[#allocation2 + $0x208] sm:$0xff]
    %v136 = vld [vmem:[#allocation2 + $0x210] sm:$0xff]
    %v137 = vld [vmem:[#allocation2 + $0x218] sm:$0xff]
    %v138 = vld [vmem:[#allocation2 + $0x220] sm:$0xff]
    %v139 = vld [vmem:[#allocation2 + $0x228] sm:$0xff]
    %v140 = vld [vmem:[#allocation2 + $0x230] sm:$0xff]
    %v141 = vld [vmem:[#allocation2 + $0x238] sm:$0xff]
    %v142 = vld [vmem:[#allocation2 + $0x240] sm:$0xff]
    %v143 = vld [vmem:[#allocation2 + $0x248] sm:$0xff]
    %v144 = vld [vmem:[#allocation2 + $0x250] sm:$0xff]
    %v145 = vld [vmem:[#allocation2 + $0x258] sm:$0xff]
    %v146 = vld [vmem:[#allocation2 + $0x260] sm:$0xff]
    %v147 = vld [vmem:[#allocation2 + $0x268] sm:$0xff]
    %v148 = vld [vmem:[#allocation2 + $0x270] sm:$0xff]
    %v149 = vld [vmem:[#allocation2 + $0x278] sm:$0xff]
    %v150 = vld [vmem:[#allocation2 + $0x280] sm:$0xff]
    %v151 = vld [vmem:[#allocation2 + $0x288] sm:$0xff]
    %v152 = vld [vmem:[#allocation2 + $0x290] sm:$0xff]
    %v153 = vld [vmem:[#allocation2 + $0x298] sm:$0xff]
    %v154 = vld [vmem:[#allocation2 + $0x2a0] sm:$0xff]
    %v155 = vld [vmem:[#allocation2 + $0x2a8] sm:$0xff]
    %v156 = vld [vmem:[#allocation2 + $0x2b0] sm:$0xff]
    %v157 = vld [vmem:[#allocation2 + $0x2b8] sm:$0xff]
    %v158 = vld [vmem:[#allocation2 + $0x2c0] sm:$0xff]
    %v159 = vld [vmem:[#allocation2 + $0x2c8] sm:$0xff]
    %v160 = vld [vmem:[#allocation2 + $0x2d0] sm:$0xff]
    %v161 = vld [vmem:[#allocation2 + $0x2d8] sm:$0xff]
    %v162 = vld [vmem:[#allocation2 + $0x2e0] sm:$0xff]
    %v163 = vld [vmem:[#allocation2 + $0x2e8] sm:$0xff]
    %v164 = vld [vmem:[#allocation2 + $0x2f0] sm:$0xff]
    %v165 = vld [vmem:[#allocation2 + $0x2f8] sm:$0xff]
    %v166 = vld [vmem:[#allocation2 + $0x300] sm:$0xff]
    %v167 = vld [vmem:[#allocation2 + $0x308] sm:$0xff]
    %v168 = vld [vmem:[#allocation2 + $0x310] sm:$0xff]
    %v169 = vld [vmem:[#allocation2 + $0x318] sm:$0xff]
    %v170 = vld [vmem:[#allocation2 + $0x320] sm:$0xff]
    %v171 = vld [vmem:[#allocation2 + $0x328] sm:$0xff]
    %v172 = vld [vmem:[#allocation2 + $0x330] sm:$0xff]
    %v173 = vld [vmem:[#allocation2 + $0x338] sm:$0xff]
    %v174 = vld [vmem:[#allocation2 + $0x340] sm:$0xff]
    %v175 = vld [vmem:[#allocation2 + $0x348] sm:$0xff]
    %v176 = vld [vmem:[#allocation2 + $0x350] sm:$0xff]
    %v177 = vld [vmem:[#allocation2 + $0x358] sm:$0xff]
    %v178 = vld [vmem:[#allocation2 + $0x360] sm:$0xff]
    %v179 = vld [vmem:[#allocation2 + $0x368] sm:$0xff]
    %v180 = vld [vmem:[#allocation2 + $0x370] sm:$0xff]
    %v181 = vld [vmem:[#allocation2 + $0x378] sm:$0xff]
    %v182 = vld [vmem:[#allocation2 + $0x380] sm:$0xff]
    %v183 = vld [vmem:[#allocation2 + $0x388] sm:$0xff]
    %v184 = vld [vmem:[#allocation2 + $0x390] sm:$0xff]
    %v185 = vld [vmem:[#allocation2 + $0x398] sm:$0xff]
    %v186 = vld [vmem:[#allocation2 + $0x3a0] sm:$0xff]
    %v187 = vld [vmem:[#allocation2 + $0x3a8] sm:$0xff]
    %v188 = vld [vmem:[#allocation2 + $0x3b0] sm:$0xff]
    %v189 = vld [vmem:[#allocation2 + $0x3b8] sm:$0xff]
    %v190 = vld [vmem:[#allocation2 + $0x3c0] sm:$0xff]
    %v191 = vld [vmem:[#allocation2 + $0x3c8] sm:$0xff]
    %v192 = vld [vmem:[#allocation2 + $0x3d0] sm:$0xff]
    %v193 = vld [vmem:[#allocation2 + $0x3d8] sm:$0xff]
    %v194 = vld [vmem:[#allocation2 + $0x3e0] sm:$0xff]
    %v195 = vld [vmem:[#allocation2 + $0x3e8] sm:$0xff]
    %v196 = vld [vmem:[#allocation2 + $0x3f0] sm:$0xff]
    %v197 = vld [vmem:[#allocation2 + $0x3f8] sm:$0xff]
    %v198 = vld [vmem:[#allocation2 + $0x400] sm:$0xff]
    %v199 = vld [vmem:[#allocation2 + $0x408] sm:$0xff]
    %v200 = vld [vmem:[#allocation2 + $0x410] sm:$0xff]
    %v201 = vld [vmem:[#allocation2 + $0x418] sm:$0xff]
    %v202 = vld [vmem:[#allocation2 + $0x420] sm:$0xff]
    %v203 = vld [vmem:[#allocation2 + $0x428] sm:$0xff]
    %v204 = vld [vmem:[#allocation2 + $0x430] sm:$0xff]
    %v205 = vld [vmem:[#allocation2 + $0x438] sm:$0xff]
    %v206 = vld [vmem:[#allocation2 + $0x440] sm:$0xff]
    %v207 = vld [vmem:[#allocation2 + $0x448] sm:$0xff]
    %v208 = vld [vmem:[#allocation2 + $0x450] sm:$0xff]
    %v209 = vld [vmem:[#allocation2 + $0x458] sm:$0xff]
    %v210 = vld [vmem:[#allocation2 + $0x460] sm:$0xff]
    %v211 = vld [vmem:[#allocation2 + $0x468] sm:$0xff]
    %v212 = vld [vmem:[#allocation2 + $0x470] sm:$0xff]
    %v213 = vld [vmem:[#allocation2 + $0x478] sm:$0xff]
    %v214 = vld [vmem:[#allocation2 + $0x480] sm:$0xff]
    %v215 = vld [vmem:[#allocation2 + $0x488] sm:$0xff]
    %v216 = vld [vmem:[#allocation2 + $0x490] sm:$0xff]
    %v217 = vld [vmem:[#allocation2 + $0x498] sm:$0xff]
    %v218 = vld [vmem:[#allocation2 + $0x4a0] sm:$0xff]
    %v219 = vld [vmem:[#allocation2 + $0x4a8] sm:$0xff]
    %v220 = vld [vmem:[#allocation2 + $0x4b0] sm:$0xff]
    %v221 = vld [vmem:[#allocation2 + $0x4b8] sm:$0xff]
    %v222 = vld [vmem:[#allocation2 + $0x4c0] sm:$0xff]
    %v223 = vld [vmem:[#allocation2 + $0x4c8] sm:$0xff]
    %v224 = vld [vmem:[#allocation2 + $0x4d0] sm:$0xff]
    %v225 = vld [vmem:[#allocation2 + $0x4d8] sm:$0xff]
    %v226 = vld [vmem:[#allocation2 + $0x4e0] sm:$0xff]
    %v227 = vld [vmem:[#allocation2 + $0x4e8] sm:$0xff]
    %v228 = vld [vmem:[#allocation2 + $0x4f0] sm:$0xff]
    %v229 = vld [vmem:[#allocation2 + $0x4f8] sm:$0xff]
    %v230 = vld [vmem:[#allocation2 + $0x500] sm:$0xff]
    %v231 = vld [vmem:[#allocation2 + $0x508] sm:$0xff]
    %v232 = vld [vmem:[#allocation2 + $0x510] sm:$0xff]
    %v233 = vld [vmem:[#allocation2 + $0x518] sm:$0xff]
    %v234 = vld [vmem:[#allocation2 + $0x520] sm:$0xff]
    %v235 = vld [vmem:[#allocation2 + $0x528] sm:$0xff]
    %v236 = vld [vmem:[#allocation2 + $0x530] sm:$0xff]
    %v237 = vld [vmem:[#allocation2 + $0x538] sm:$0xff]
    %v238 = vld [vmem:[#allocation2 + $0x540] sm:$0xff]
    %v239 = vld [vmem:[#allocation2 + $0x548] sm:$0xff]
    %v240 = vld [vmem:[#allocation2 + $0x550] sm:$0xff]
    %v241 = vld [vmem:[#allocation2 + $0x558] sm:$0xff]
    %v242 = vld [vmem:[#allocation2 + $0x560] sm:$0xff]
    %v243 = vld [vmem:[#allocation2 + $0x568] sm:$0xff]
    %v244 = vld [vmem:[#allocation2 + $0x570] sm:$0xff]
    %v245 = vld [vmem:[#allocation2 + $0x578] sm:$0xff]
    %v246 = vld [vmem:[#allocation2 + $0x580] sm:$0xff]
    %v247 = vld [vmem:[#allocation2 + $0x588] sm:$0xff]
    %v248 = vld [vmem:[#allocation2 + $0x590] sm:$0xff]
    %v249 = vld [vmem:[#allocation2 + $0x598] sm:$0xff]
    %v250 = vld [vmem:[#allocation2 + $0x5a0] sm:$0xff]
    %v251 = vld [vmem:[#allocation2 + $0x5a8] sm:$0xff]
    %v252 = vld [vmem:[#allocation2 + $0x5b0] sm:$0xff]
    %v253 = vld [vmem:[#allocation2 + $0x5b8] sm:$0xff]
    %v254 = vld [vmem:[#allocation2 + $0x5c0] sm:$0xff]
    %v255 = vld [vmem:[#allocation2 + $0x5c8] sm:$0xff]
    %v256 = vld [vmem:[#allocation2 + $0x5d0] sm:$0xff]
    %v257 = vld [vmem:[#allocation2 + $0x5d8] sm:$0xff]
    %v258 = vld [vmem:[#allocation2 + $0x5e0] sm:$0xff]
    %v259 = vld [vmem:[#allocation2 + $0x5e8] sm:$0xff]
    %v260 = vld [vmem:[#allocation2 + $0x5f0] sm:$0xff]
    %v261 = vld [vmem:[#allocation2 + $0x5f8] sm:$0xff]
    %v262 = vld [vmem:[#allocation2 + $0x600] sm:$0xff]
    %v263 = vld [vmem:[#allocation2 + $0x608] sm:$0xff]
    %v264 = vld [vmem:[#allocation2 + $0x610] sm:$0xff]
    %v265 = vld [vmem:[#allocation2 + $0x618] sm:$0xff]
    %v266 = vld [vmem:[#allocation2 + $0x620] sm:$0xff]
    %v267 = vld [vmem:[#allocation2 + $0x628] sm:$0xff]
    %v268 = vld [vmem:[#allocation2 + $0x630] sm:$0xff]
    %v269 = vld [vmem:[#allocation2 + $0x638] sm:$0xff]
    %v270 = vld [vmem:[#allocation2 + $0x640] sm:$0xff]
    %v271 = vld [vmem:[#allocation2 + $0x648] sm:$0xff]
    %v272 = vld [vmem:[#allocation2 + $0x650] sm:$0xff]
    %v273 = vld [vmem:[#allocation2 + $0x658] sm:$0xff]
    %v274 = vld [vmem:[#allocation2 + $0x660] sm:$0xff]
    %v275 = vld [vmem:[#allocation2 + $0x668] sm:$0xff]
    %v276 = vld [vmem:[#allocation2 + $0x670] sm:$0xff]
    %v277 = vld [vmem:[#allocation2 + $0x678] sm:$0xff]
    %v278 = vld [vmem:[#allocation2 + $0x680] sm:$0xff]
    %v279 = vld [vmem:[#allocation2 + $0x688] sm:$0xff]
    %v280 = vld [vmem:[#allocation2 + $0x690] sm:$0xff]
    %v281 = vld [vmem:[#allocation2 + $0x698] sm:$0xff]
    %v282 = vld [vmem:[#allocation2 + $0x6a0] sm:$0xff]
    %v283 = vld [vmem:[#allocation2 + $0x6a8] sm:$0xff]
    %v284 = vld [vmem:[#allocation2 + $0x6b0] sm:$0xff]
    %v285 = vld [vmem:[#allocation2 + $0x6b8] sm:$0xff]
    %v286 = vld [vmem:[#allocation2 + $0x6c0] sm:$0xff]
    %v287 = vld [vmem:[#allocation2 + $0x6c8] sm:$0xff]
    %v288 = vld [vmem:[#allocation2 + $0x6d0] sm:$0xff]
    %v289 = vld [vmem:[#allocation2 + $0x6d8] sm:$0xff]
    %v290 = vld [vmem:[#allocation2 + $0x6e0] sm:$0xff]
    %v291 = vld [vmem:[#allocation2 + $0x6e8] sm:$0xff]
    %v292 = vld [vmem:[#allocation2 + $0x6f0] sm:$0xff]
    %v293 = vld [vmem:[#allocation2 + $0x6f8] sm:$0xff]
    %v294 = vld [vmem:[%s2] sm:$0xf]
    %v296 = vlaneseq
    %v297 = vshrl.u32 %v296, 7
    %v298 = vsub.s32 0, %v297
    %v299 = vrot.slane %v294, %v298
    %v300 = vlaneseq
    %v301 = vshrl.u32 %v300, 7
    %v302 = vsub.s32 1, %v301
    %v303 = vrot.slane %v294, %v302
    %v304 = vlaneseq
    %v305 = vshrl.u32 %v304, 7
    %v306 = vsub.s32 2, %v305
    %v307 = vrot.slane %v294, %v306
    %v308 = vlaneseq
    %v309 = vshrl.u32 %v308, 7
    %v310 = vsub.s32 3, %v309
    %v311 = vrot.slane %v294, %v310
    %v324 = vunpack.c.l.b16 %v62
    %v325 = vunpack.c.h.b16 %v62
    %v326 = vunpack.c.l.b16 %v63
    %v327 = vunpack.c.h.b16 %v63
    %v328 = vunpack.c.l.b16 %v64
    %v329 = vunpack.c.h.b16 %v64
    %v330 = vunpack.c.l.b16 %v65
    %v331 = vunpack.c.l.b16 %v66
    %v332 = vunpack.c.h.b16 %v66
    %v333 = vunpack.c.l.b16 %v67
    %v334 = vunpack.c.h.b16 %v67
    %v335 = vunpack.c.l.b16 %v68
    %v336 = vunpack.c.h.b16 %v68
    %v337 = vunpack.c.l.b16 %v69
    %v338 = vpack.c.b16 %v331, %v324
    %v339 = vpack.c.b16 %v332, %v325
    %v340 = vpack.c.b16 %v333, %v326
    %v341 = vpack.c.b16 %v334, %v327
    %v342 = vpack.c.b16 %v335, %v328
    %v343 = vpack.c.b16 %v336, %v329
    %v344 = vpack.c.b16 %v337, %v330
    %v576 = vunpack.c.l.b16 %v70
    %v577 = vunpack.c.h.b16 %v70
    %v578 = vunpack.c.l.b16 %v71
    %v579 = vunpack.c.h.b16 %v71
    %v580 = vunpack.c.l.b16 %v72
    %v581 = vunpack.c.h.b16 %v72
    %v582 = vunpack.c.l.b16 %v73
    %v583 = vunpack.c.h.b16 %v73
    %v584 = vunpack.c.l.b16 %v74
    %v585 = vunpack.c.h.b16 %v74
    %v586 = vunpack.c.l.b16 %v75
    %v587 = vunpack.c.h.b16 %v75
    %v588 = vunpack.c.l.b16 %v76
    %v589 = vunpack.c.h.b16 %v76
    %v590 = vunpack.c.l.b16 %v77
    %v591 = vunpack.c.h.b16 %v77
    %v592 = vunpack.c.l.b16 %v78
    %v593 = vunpack.c.h.b16 %v78
    %v594 = vunpack.c.l.b16 %v79
    %v595 = vunpack.c.h.b16 %v79
    %v596 = vunpack.c.l.b16 %v80
    %v597 = vunpack.c.h.b16 %v80
    %v598 = vunpack.c.l.b16 %v81
    %v599 = vunpack.c.h.b16 %v81
    %v600 = vunpack.c.l.b16 %v82
    %v601 = vunpack.c.h.b16 %v82
    %v602 = vunpack.c.l.b16 %v83
    %v603 = vunpack.c.h.b16 %v83
    %v604 = vunpack.c.l.b16 %v84
    %v605 = vunpack.c.h.b16 %v84
    %v606 = vunpack.c.l.b16 %v85
    %v607 = vunpack.c.h.b16 %v85
    %v608 = vunpack.c.l.b16 %v86
    %v609 = vunpack.c.h.b16 %v86
    %v610 = vunpack.c.l.b16 %v87
    %v611 = vunpack.c.h.b16 %v87
    %v612 = vunpack.c.l.b16 %v88
    %v613 = vunpack.c.h.b16 %v88
    %v614 = vunpack.c.l.b16 %v89
    %v615 = vunpack.c.h.b16 %v89
    %v616 = vunpack.c.l.b16 %v90
    %v617 = vunpack.c.h.b16 %v90
    %v618 = vunpack.c.l.b16 %v91
    %v619 = vunpack.c.h.b16 %v91
    %v620 = vunpack.c.l.b16 %v92
    %v621 = vunpack.c.h.b16 %v92
    %v622 = vunpack.c.l.b16 %v93
    %v623 = vunpack.c.h.b16 %v93
    %v624 = vunpack.c.l.b16 %v94
    %v625 = vunpack.c.h.b16 %v94
    %v626 = vunpack.c.l.b16 %v95
    %v627 = vunpack.c.h.b16 %v95
    %v628 = vunpack.c.l.b16 %v96
    %v629 = vunpack.c.h.b16 %v96
    %v630 = vunpack.c.l.b16 %v97
    %v631 = vunpack.c.h.b16 %v97
    %v632 = vunpack.c.l.b16 %v98
    %v633 = vunpack.c.h.b16 %v98
    %v634 = vunpack.c.l.b16 %v99
    %v635 = vunpack.c.h.b16 %v99
    %v636 = vunpack.c.l.b16 %v100
    %v637 = vunpack.c.h.b16 %v100
    %v638 = vunpack.c.l.b16 %v101
    %v639 = vunpack.c.h.b16 %v101
    %v640 = vunpack.c.l.b16 %v102
    %v641 = vunpack.c.h.b16 %v102
    %v642 = vunpack.c.l.b16 %v103
    %v643 = vunpack.c.h.b16 %v103
    %v644 = vunpack.c.l.b16 %v104
    %v645 = vunpack.c.h.b16 %v104
    %v646 = vunpack.c.l.b16 %v105
    %v647 = vunpack.c.h.b16 %v105
    %v648 = vunpack.c.l.b16 %v106
    %v649 = vunpack.c.h.b16 %v106
    %v650 = vunpack.c.l.b16 %v107
    %v651 = vunpack.c.h.b16 %v107
    %v652 = vunpack.c.l.b16 %v108
    %v653 = vunpack.c.h.b16 %v108
    %v654 = vunpack.c.l.b16 %v109
    %v655 = vunpack.c.h.b16 %v109
    %v656 = vunpack.c.l.b16 %v110
    %v657 = vunpack.c.h.b16 %v110
    %v658 = vunpack.c.l.b16 %v111
    %v659 = vunpack.c.h.b16 %v111
    %v660 = vunpack.c.l.b16 %v112
    %v661 = vunpack.c.h.b16 %v112
    %v662 = vunpack.c.l.b16 %v113
    %v663 = vunpack.c.h.b16 %v113
    %v664 = vunpack.c.l.b16 %v114
    %v665 = vunpack.c.h.b16 %v114
    %v666 = vunpack.c.l.b16 %v115
    %v667 = vunpack.c.h.b16 %v115
    %v668 = vunpack.c.l.b16 %v116
    %v669 = vunpack.c.h.b16 %v116
    %v670 = vunpack.c.l.b16 %v117
    %v671 = vunpack.c.h.b16 %v117
    %v672 = vunpack.c.l.b16 %v118
    %v673 = vunpack.c.h.b16 %v118
    %v674 = vunpack.c.l.b16 %v119
    %v675 = vunpack.c.h.b16 %v119
    %v676 = vunpack.c.l.b16 %v120
    %v677 = vunpack.c.h.b16 %v120
    %v678 = vunpack.c.l.b16 %v121
    %v679 = vunpack.c.h.b16 %v121
    %v680 = vunpack.c.l.b16 %v122
    %v681 = vunpack.c.h.b16 %v122
    %v682 = vunpack.c.l.b16 %v123
    %v683 = vunpack.c.h.b16 %v123
    %v684 = vunpack.c.l.b16 %v124
    %v685 = vunpack.c.h.b16 %v124
    %v686 = vunpack.c.l.b16 %v125
    %v687 = vunpack.c.h.b16 %v125
    %v688 = vunpack.c.l.b16 %v126
    %v689 = vunpack.c.h.b16 %v126
    %v690 = vunpack.c.l.b16 %v127
    %v691 = vunpack.c.h.b16 %v127
    %v692 = vunpack.c.l.b16 %v128
    %v693 = vunpack.c.h.b16 %v128
    %v694 = vunpack.c.l.b16 %v129
    %v695 = vunpack.c.h.b16 %v129
    %v696 = vunpack.c.l.b16 %v130
    %v697 = vunpack.c.h.b16 %v130
    %v698 = vunpack.c.l.b16 %v131
    %v699 = vunpack.c.h.b16 %v131
    %v700 = vunpack.c.l.b16 %v132
    %v701 = vunpack.c.h.b16 %v132
    %v702 = vunpack.c.l.b16 %v133
    %v703 = vunpack.c.h.b16 %v133
    %v704 = vunpack.c.l.b16 %v134
    %v705 = vunpack.c.h.b16 %v134
    %v706 = vunpack.c.l.b16 %v135
    %v707 = vunpack.c.h.b16 %v135
    %v708 = vunpack.c.l.b16 %v136
    %v709 = vunpack.c.h.b16 %v136
    %v710 = vunpack.c.l.b16 %v137
    %v711 = vunpack.c.h.b16 %v137
    %v712 = vunpack.c.l.b16 %v138
    %v713 = vunpack.c.h.b16 %v138
    %v714 = vunpack.c.l.b16 %v139
    %v715 = vunpack.c.h.b16 %v139
    %v716 = vunpack.c.l.b16 %v140
    %v717 = vunpack.c.h.b16 %v140
    %v718 = vunpack.c.l.b16 %v141
    %v719 = vunpack.c.h.b16 %v141
    %v720 = vunpack.c.l.b16 %v142
    %v721 = vunpack.c.h.b16 %v142
    %v722 = vunpack.c.l.b16 %v143
    %v723 = vunpack.c.h.b16 %v143
    %v724 = vunpack.c.l.b16 %v144
    %v725 = vunpack.c.h.b16 %v144
    %v726 = vunpack.c.l.b16 %v145
    %v727 = vunpack.c.h.b16 %v145
    %v728 = vunpack.c.l.b16 %v146
    %v729 = vunpack.c.h.b16 %v146
    %v730 = vunpack.c.l.b16 %v147
    %v731 = vunpack.c.h.b16 %v147
    %v732 = vunpack.c.l.b16 %v148
    %v733 = vunpack.c.h.b16 %v148
    %v734 = vunpack.c.l.b16 %v149
    %v735 = vunpack.c.h.b16 %v149
    %v736 = vunpack.c.l.b16 %v150
    %v737 = vunpack.c.h.b16 %v150
    %v738 = vunpack.c.l.b16 %v151
    %v739 = vunpack.c.h.b16 %v151
    %v740 = vunpack.c.l.b16 %v152
    %v741 = vunpack.c.h.b16 %v152
    %v742 = vunpack.c.l.b16 %v153
    %v743 = vunpack.c.h.b16 %v153
    %v744 = vunpack.c.l.b16 %v154
    %v745 = vunpack.c.h.b16 %v154
    %v746 = vunpack.c.l.b16 %v155
    %v747 = vunpack.c.h.b16 %v155
    %v748 = vunpack.c.l.b16 %v156
    %v749 = vunpack.c.h.b16 %v156
    %v750 = vunpack.c.l.b16 %v157
    %v751 = vunpack.c.h.b16 %v157
    %v752 = vunpack.c.l.b16 %v158
    %v753 = vunpack.c.h.b16 %v158
    %v754 = vunpack.c.l.b16 %v159
    %v755 = vunpack.c.h.b16 %v159
    %v756 = vunpack.c.l.b16 %v160
    %v757 = vunpack.c.h.b16 %v160
    %v758 = vunpack.c.l.b16 %v161
    %v759 = vunpack.c.h.b16 %v161
    %v760 = vunpack.c.l.b16 %v162
    %v761 = vunpack.c.h.b16 %v162
    %v762 = vunpack.c.l.b16 %v163
    %v763 = vunpack.c.h.b16 %v163
    %v764 = vunpack.c.l.b16 %v164
    %v765 = vunpack.c.h.b16 %v164
    %v766 = vunpack.c.l.b16 %v165
    %v767 = vunpack.c.h.b16 %v165
    %v768 = vunpack.c.l.b16 %v166
    %v769 = vunpack.c.h.b16 %v166
    %v770 = vunpack.c.l.b16 %v167
    %v771 = vunpack.c.h.b16 %v167
    %v772 = vunpack.c.l.b16 %v168
    %v773 = vunpack.c.h.b16 %v168
    %v774 = vunpack.c.l.b16 %v169
    %v775 = vunpack.c.h.b16 %v169
    %v776 = vunpack.c.l.b16 %v170
    %v777 = vunpack.c.h.b16 %v170
    %v778 = vunpack.c.l.b16 %v171
    %v779 = vunpack.c.h.b16 %v171
    %v780 = vunpack.c.l.b16 %v172
    %v781 = vunpack.c.h.b16 %v172
    %v782 = vunpack.c.l.b16 %v173
    %v783 = vunpack.c.h.b16 %v173
    %v784 = vunpack.c.l.b16 %v174
    %v785 = vunpack.c.h.b16 %v174
    %v786 = vunpack.c.l.b16 %v175
    %v787 = vunpack.c.h.b16 %v175
    %v788 = vunpack.c.l.b16 %v176
    %v789 = vunpack.c.h.b16 %v176
    %v790 = vunpack.c.l.b16 %v177
    %v791 = vunpack.c.h.b16 %v177
    %v792 = vunpack.c.l.b16 %v178
    %v793 = vunpack.c.h.b16 %v178
    %v794 = vunpack.c.l.b16 %v179
    %v795 = vunpack.c.h.b16 %v179
    %v796 = vunpack.c.l.b16 %v180
    %v797 = vunpack.c.h.b16 %v180
    %v798 = vunpack.c.l.b16 %v181
    %v799 = vunpack.c.h.b16 %v181
    %v800 = vunpack.c.l.b16 %v182
    %v801 = vunpack.c.h.b16 %v182
    %v802 = vunpack.c.l.b16 %v183
    %v803 = vunpack.c.h.b16 %v183
    %v804 = vunpack.c.l.b16 %v184
    %v805 = vunpack.c.h.b16 %v184
    %v806 = vunpack.c.l.b16 %v185
    %v807 = vunpack.c.h.b16 %v185
    %v808 = vunpack.c.l.b16 %v186
    %v809 = vunpack.c.h.b16 %v186
    %v810 = vunpack.c.l.b16 %v187
    %v811 = vunpack.c.h.b16 %v187
    %v812 = vunpack.c.l.b16 %v188
    %v813 = vunpack.c.h.b16 %v188
    %v814 = vunpack.c.l.b16 %v189
    %v815 = vunpack.c.h.b16 %v189
    %v816 = vunpack.c.l.b16 %v190
    %v817 = vunpack.c.h.b16 %v190
    %v818 = vunpack.c.l.b16 %v191
    %v819 = vunpack.c.h.b16 %v191
    %v820 = vunpack.c.l.b16 %v192
    %v821 = vunpack.c.h.b16 %v192
    %v822 = vunpack.c.l.b16 %v193
    %v823 = vunpack.c.h.b16 %v193
    %v824 = vunpack.c.l.b16 %v194
    %v825 = vunpack.c.h.b16 %v194
    %v826 = vunpack.c.l.b16 %v195
    %v827 = vunpack.c.h.b16 %v195
    %v828 = vunpack.c.l.b16 %v196
    %v829 = vunpack.c.h.b16 %v196
    %v830 = vunpack.c.l.b16 %v197
    %v831 = vunpack.c.h.b16 %v197
    %v832 = vunpack.c.l.b16 %v198
    %v833 = vunpack.c.h.b16 %v198
    %v834 = vunpack.c.l.b16 %v199
    %v835 = vunpack.c.h.b16 %v199
    %v836 = vunpack.c.l.b16 %v200
    %v837 = vunpack.c.h.b16 %v200
    %v838 = vunpack.c.l.b16 %v201
    %v839 = vunpack.c.h.b16 %v201
    %v840 = vunpack.c.l.b16 %v202
    %v841 = vunpack.c.h.b16 %v202
    %v842 = vunpack.c.l.b16 %v203
    %v843 = vunpack.c.h.b16 %v203
    %v844 = vunpack.c.l.b16 %v204
    %v845 = vunpack.c.h.b16 %v204
    %v846 = vunpack.c.l.b16 %v205
    %v847 = vunpack.c.h.b16 %v205
    %v848 = vunpack.c.l.b16 %v206
    %v849 = vunpack.c.h.b16 %v206
    %v850 = vunpack.c.l.b16 %v207
    %v851 = vunpack.c.h.b16 %v207
    %v852 = vunpack.c.l.b16 %v208
    %v853 = vunpack.c.h.b16 %v208
    %v854 = vunpack.c.l.b16 %v209
    %v855 = vunpack.c.h.b16 %v209
    %v856 = vunpack.c.l.b16 %v210
    %v857 = vunpack.c.h.b16 %v210
    %v858 = vunpack.c.l.b16 %v211
    %v859 = vunpack.c.h.b16 %v211
    %v860 = vunpack.c.l.b16 %v212
    %v861 = vunpack.c.h.b16 %v212
    %v862 = vunpack.c.l.b16 %v213
    %v863 = vunpack.c.h.b16 %v213
    %v864 = vunpack.c.l.b16 %v214
    %v865 = vunpack.c.h.b16 %v214
    %v866 = vunpack.c.l.b16 %v215
    %v867 = vunpack.c.h.b16 %v215
    %v868 = vunpack.c.l.b16 %v216
    %v869 = vunpack.c.h.b16 %v216
    %v870 = vunpack.c.l.b16 %v217
    %v871 = vunpack.c.h.b16 %v217
    %v872 = vunpack.c.l.b16 %v218
    %v873 = vunpack.c.h.b16 %v218
    %v874 = vunpack.c.l.b16 %v219
    %v875 = vunpack.c.h.b16 %v219
    %v876 = vunpack.c.l.b16 %v220
    %v877 = vunpack.c.h.b16 %v220
    %v878 = vunpack.c.l.b16 %v221
    %v879 = vunpack.c.h.b16 %v221
    %v880 = vunpack.c.l.b16 %v222
    %v881 = vunpack.c.h.b16 %v222
    %v882 = vunpack.c.l.b16 %v223
    %v883 = vunpack.c.h.b16 %v223
    %v884 = vunpack.c.l.b16 %v224
    %v885 = vunpack.c.h.b16 %v224
    %v886 = vunpack.c.l.b16 %v225
    %v887 = vunpack.c.h.b16 %v225
    %v888 = vunpack.c.l.b16 %v226
    %v889 = vunpack.c.h.b16 %v226
    %v890 = vunpack.c.l.b16 %v227
    %v891 = vunpack.c.h.b16 %v227
    %v892 = vunpack.c.l.b16 %v228
    %v893 = vunpack.c.h.b16 %v228
    %v894 = vunpack.c.l.b16 %v229
    %v895 = vunpack.c.h.b16 %v229
    %v896 = vunpack.c.l.b16 %v230
    %v897 = vunpack.c.h.b16 %v230
    %v898 = vunpack.c.l.b16 %v231
    %v899 = vunpack.c.h.b16 %v231
    %v900 = vunpack.c.l.b16 %v232
    %v901 = vunpack.c.h.b16 %v232
    %v902 = vunpack.c.l.b16 %v233
    %v903 = vunpack.c.h.b16 %v233
    %v904 = vunpack.c.l.b16 %v234
    %v905 = vunpack.c.h.b16 %v234
    %v906 = vunpack.c.l.b16 %v235
    %v907 = vunpack.c.h.b16 %v235
    %v908 = vunpack.c.l.b16 %v236
    %v909 = vunpack.c.h.b16 %v236
    %v910 = vunpack.c.l.b16 %v237
    %v911 = vunpack.c.h.b16 %v237
    %v912 = vunpack.c.l.b16 %v238
    %v913 = vunpack.c.h.b16 %v238
    %v914 = vunpack.c.l.b16 %v239
    %v915 = vunpack.c.h.b16 %v239
    %v916 = vunpack.c.l.b16 %v240
    %v917 = vunpack.c.h.b16 %v240
    %v918 = vunpack.c.l.b16 %v241
    %v919 = vunpack.c.h.b16 %v241
    %v920 = vunpack.c.l.b16 %v242
    %v921 = vunpack.c.h.b16 %v242
    %v922 = vunpack.c.l.b16 %v243
    %v923 = vunpack.c.h.b16 %v243
    %v924 = vunpack.c.l.b16 %v244
    %v925 = vunpack.c.h.b16 %v244
    %v926 = vunpack.c.l.b16 %v245
    %v927 = vunpack.c.h.b16 %v245
    %v928 = vunpack.c.l.b16 %v246
    %v929 = vunpack.c.h.b16 %v246
    %v930 = vunpack.c.l.b16 %v247
    %v931 = vunpack.c.h.b16 %v247
    %v932 = vunpack.c.l.b16 %v248
    %v933 = vunpack.c.h.b16 %v248
    %v934 = vunpack.c.l.b16 %v249
    %v935 = vunpack.c.h.b16 %v249
    %v936 = vunpack.c.l.b16 %v250
    %v937 = vunpack.c.h.b16 %v250
    %v938 = vunpack.c.l.b16 %v251
    %v939 = vunpack.c.h.b16 %v251
    %v940 = vunpack.c.l.b16 %v252
    %v941 = vunpack.c.h.b16 %v252
    %v942 = vunpack.c.l.b16 %v253
    %v943 = vunpack.c.h.b16 %v253
    %v944 = vunpack.c.l.b16 %v254
    %v945 = vunpack.c.h.b16 %v254
    %v946 = vunpack.c.l.b16 %v255
    %v947 = vunpack.c.h.b16 %v255
    %v948 = vunpack.c.l.b16 %v256
    %v949 = vunpack.c.h.b16 %v256
    %v950 = vunpack.c.l.b16 %v257
    %v951 = vunpack.c.h.b16 %v257
    %v952 = vunpack.c.l.b16 %v258
    %v953 = vunpack.c.h.b16 %v258
    %v954 = vunpack.c.l.b16 %v259
    %v955 = vunpack.c.h.b16 %v259
    %v956 = vunpack.c.l.b16 %v260
    %v957 = vunpack.c.h.b16 %v260
    %v958 = vunpack.c.l.b16 %v261
    %v959 = vunpack.c.h.b16 %v261
    %v960 = vunpack.c.l.b16 %v262
    %v961 = vunpack.c.h.b16 %v262
    %v962 = vunpack.c.l.b16 %v263
    %v963 = vunpack.c.h.b16 %v263
    %v964 = vunpack.c.l.b16 %v264
    %v965 = vunpack.c.h.b16 %v264
    %v966 = vunpack.c.l.b16 %v265
    %v967 = vunpack.c.h.b16 %v265
    %v968 = vunpack.c.l.b16 %v266
    %v969 = vunpack.c.h.b16 %v266
    %v970 = vunpack.c.l.b16 %v267
    %v971 = vunpack.c.h.b16 %v267
    %v972 = vunpack.c.l.b16 %v268
    %v973 = vunpack.c.h.b16 %v268
    %v974 = vunpack.c.l.b16 %v269
    %v975 = vunpack.c.h.b16 %v269
    %v976 = vunpack.c.l.b16 %v270
    %v977 = vunpack.c.h.b16 %v270
    %v978 = vunpack.c.l.b16 %v271
    %v979 = vunpack.c.h.b16 %v271
    %v980 = vunpack.c.l.b16 %v272
    %v981 = vunpack.c.h.b16 %v272
    %v982 = vunpack.c.l.b16 %v273
    %v983 = vunpack.c.h.b16 %v273
    %v984 = vunpack.c.l.b16 %v274
    %v985 = vunpack.c.h.b16 %v274
    %v986 = vunpack.c.l.b16 %v275
    %v987 = vunpack.c.h.b16 %v275
    %v988 = vunpack.c.l.b16 %v276
    %v989 = vunpack.c.h.b16 %v276
    %v990 = vunpack.c.l.b16 %v277
    %v991 = vunpack.c.h.b16 %v277
    %v992 = vunpack.c.l.b16 %v278
    %v993 = vunpack.c.h.b16 %v278
    %v994 = vunpack.c.l.b16 %v279
    %v995 = vunpack.c.h.b16 %v279
    %v996 = vunpack.c.l.b16 %v280
    %v997 = vunpack.c.h.b16 %v280
    %v998 = vunpack.c.l.b16 %v281
    %v999 = vunpack.c.h.b16 %v281
    %v1000 = vunpack.c.l.b16 %v282
    %v1001 = vunpack.c.h.b16 %v282
    %v1002 = vunpack.c.l.b16 %v283
    %v1003 = vunpack.c.h.b16 %v283
    %v1004 = vunpack.c.l.b16 %v284
    %v1005 = vunpack.c.h.b16 %v284
    %v1006 = vunpack.c.l.b16 %v285
    %v1007 = vunpack.c.h.b16 %v285
    %v1008 = vunpack.c.l.b16 %v286
    %v1009 = vunpack.c.h.b16 %v286
    %v1010 = vunpack.c.l.b16 %v287
    %v1011 = vunpack.c.h.b16 %v287
    %v1012 = vunpack.c.l.b16 %v288
    %v1013 = vunpack.c.h.b16 %v288
    %v1014 = vunpack.c.l.b16 %v289
    %v1015 = vunpack.c.h.b16 %v289
    %v1016 = vunpack.c.l.b16 %v290
    %v1017 = vunpack.c.h.b16 %v290
    %v1018 = vunpack.c.l.b16 %v291
    %v1019 = vunpack.c.h.b16 %v291
    %v1020 = vunpack.c.l.b16 %v292
    %v1021 = vunpack.c.h.b16 %v292
    %v1022 = vunpack.c.l.b16 %v293
    %v1023 = vunpack.c.h.b16 %v293
    %v1024 = vpack.c.b16 %v580, %v576
    %v1025 = vpack.c.b16 %v581, %v577
    %v1026 = vpack.c.b16 %v582, %v578
    %v1027 = vpack.c.b16 %v583, %v579
    %v1028 = vpack.c.b16 %v588, %v584
    %v1029 = vpack.c.b16 %v589, %v585
    %v1030 = vpack.c.b16 %v590, %v586
    %v1031 = vpack.c.b16 %v591, %v587
    %v1032 = vpack.c.b16 %v596, %v592
    %v1033 = vpack.c.b16 %v597, %v593
    %v1034 = vpack.c.b16 %v598, %v594
    %v1035 = vpack.c.b16 %v599, %v595
    %v1036 = vpack.c.b16 %v604, %v600
    %v1037 = vpack.c.b16 %v605, %v601
    %v1038 = vpack.c.b16 %v606, %v602
    %v1039 = vpack.c.b16 %v607, %v603
    %v1040 = vpack.c.b16 %v612, %v608
    %v1041 = vpack.c.b16 %v613, %v609
    %v1042 = vpack.c.b16 %v614, %v610
    %v1043 = vpack.c.b16 %v615, %v611
    %v1044 = vpack.c.b16 %v620, %v616
    %v1045 = vpack.c.b16 %v621, %v617
    %v1046 = vpack.c.b16 %v622, %v618
    %v1047 = vpack.c.b16 %v623, %v619
    %v1048 = vpack.c.b16 %v628, %v624
    %v1049 = vpack.c.b16 %v629, %v625
    %v1050 = vpack.c.b16 %v630, %v626
    %v1051 = vpack.c.b16 %v631, %v627
    %v1052 = vpack.c.b16 %v636, %v632
    %v1053 = vpack.c.b16 %v637, %v633
    %v1054 = vpack.c.b16 %v638, %v634
    %v1055 = vpack.c.b16 %v639, %v635
    %v1056 = vpack.c.b16 %v644, %v640
    %v1057 = vpack.c.b16 %v645, %v641
    %v1058 = vpack.c.b16 %v646, %v642
    %v1059 = vpack.c.b16 %v647, %v643
    %v1060 = vpack.c.b16 %v652, %v648
    %v1061 = vpack.c.b16 %v653, %v649
    %v1062 = vpack.c.b16 %v654, %v650
    %v1063 = vpack.c.b16 %v655, %v651
    %v1064 = vpack.c.b16 %v660, %v656
    %v1065 = vpack.c.b16 %v661, %v657
    %v1066 = vpack.c.b16 %v662, %v658
    %v1067 = vpack.c.b16 %v663, %v659
    %v1068 = vpack.c.b16 %v668, %v664
    %v1069 = vpack.c.b16 %v669, %v665
    %v1070 = vpack.c.b16 %v670, %v666
    %v1071 = vpack.c.b16 %v671, %v667
    %v1072 = vpack.c.b16 %v676, %v672
    %v1073 = vpack.c.b16 %v677, %v673
    %v1074 = vpack.c.b16 %v678, %v674
    %v1075 = vpack.c.b16 %v679, %v675
    %v1076 = vpack.c.b16 %v684, %v680
    %v1077 = vpack.c.b16 %v685, %v681
    %v1078 = vpack.c.b16 %v686, %v682
    %v1079 = vpack.c.b16 %v687, %v683
    %v1080 = vpack.c.b16 %v692, %v688
    %v1081 = vpack.c.b16 %v693, %v689
    %v1082 = vpack.c.b16 %v694, %v690
    %v1083 = vpack.c.b16 %v695, %v691
    %v1084 = vpack.c.b16 %v700, %v696
    %v1085 = vpack.c.b16 %v701, %v697
    %v1086 = vpack.c.b16 %v702, %v698
    %v1087 = vpack.c.b16 %v703, %v699
    %v1088 = vpack.c.b16 %v708, %v704
    %v1089 = vpack.c.b16 %v709, %v705
    %v1090 = vpack.c.b16 %v710, %v706
    %v1091 = vpack.c.b16 %v711, %v707
    %v1092 = vpack.c.b16 %v716, %v712
    %v1093 = vpack.c.b16 %v717, %v713
    %v1094 = vpack.c.b16 %v718, %v714
    %v1095 = vpack.c.b16 %v719, %v715
    %v1096 = vpack.c.b16 %v724, %v720
    %v1097 = vpack.c.b16 %v725, %v721
    %v1098 = vpack.c.b16 %v726, %v722
    %v1099 = vpack.c.b16 %v727, %v723
    %v1100 = vpack.c.b16 %v732, %v728
    %v1101 = vpack.c.b16 %v733, %v729
    %v1102 = vpack.c.b16 %v734, %v730
    %v1103 = vpack.c.b16 %v735, %v731
    %v1104 = vpack.c.b16 %v740, %v736
    %v1105 = vpack.c.b16 %v741, %v737
    %v1106 = vpack.c.b16 %v742, %v738
    %v1107 = vpack.c.b16 %v743, %v739
    %v1108 = vpack.c.b16 %v748, %v744
    %v1109 = vpack.c.b16 %v749, %v745
    %v1110 = vpack.c.b16 %v750, %v746
    %v1111 = vpack.c.b16 %v751, %v747
    %v1112 = vpack.c.b16 %v756, %v752
    %v1113 = vpack.c.b16 %v757, %v753
    %v1114 = vpack.c.b16 %v758, %v754
    %v1115 = vpack.c.b16 %v759, %v755
    %v1116 = vpack.c.b16 %v764, %v760
    %v1117 = vpack.c.b16 %v765, %v761
    %v1118 = vpack.c.b16 %v766, %v762
    %v1119 = vpack.c.b16 %v767, %v763
    %v1120 = vpack.c.b16 %v772, %v768
    %v1121 = vpack.c.b16 %v773, %v769
    %v1122 = vpack.c.b16 %v774, %v770
    %v1123 = vpack.c.b16 %v775, %v771
    %v1124 = vpack.c.b16 %v780, %v776
    %v1125 = vpack.c.b16 %v781, %v777
    %v1126 = vpack.c.b16 %v782, %v778
    %v1127 = vpack.c.b16 %v783, %v779
    %v1128 = vpack.c.b16 %v788, %v784
    %v1129 = vpack.c.b16 %v789, %v785
    %v1130 = vpack.c.b16 %v790, %v786
    %v1131 = vpack.c.b16 %v791, %v787
    %v1132 = vpack.c.b16 %v796, %v792
    %v1133 = vpack.c.b16 %v797, %v793
    %v1134 = vpack.c.b16 %v798, %v794
    %v1135 = vpack.c.b16 %v799, %v795
    %v1136 = vpack.c.b16 %v804, %v800
    %v1137 = vpack.c.b16 %v805, %v801
    %v1138 = vpack.c.b16 %v806, %v802
    %v1139 = vpack.c.b16 %v807, %v803
    %v1140 = vpack.c.b16 %v812, %v808
    %v1141 = vpack.c.b16 %v813, %v809
    %v1142 = vpack.c.b16 %v814, %v810
    %v1143 = vpack.c.b16 %v815, %v811
    %v1144 = vpack.c.b16 %v820, %v816
    %v1145 = vpack.c.b16 %v821, %v817
    %v1146 = vpack.c.b16 %v822, %v818
    %v1147 = vpack.c.b16 %v823, %v819
    %v1148 = vpack.c.b16 %v828, %v824
    %v1149 = vpack.c.b16 %v829, %v825
    %v1150 = vpack.c.b16 %v830, %v826
    %v1151 = vpack.c.b16 %v831, %v827
    %v1152 = vpack.c.b16 %v836, %v832
    %v1153 = vpack.c.b16 %v837, %v833
    %v1154 = vpack.c.b16 %v838, %v834
    %v1155 = vpack.c.b16 %v839, %v835
    %v1156 = vpack.c.b16 %v844, %v840
    %v1157 = vpack.c.b16 %v845, %v841
    %v1158 = vpack.c.b16 %v846, %v842
    %v1159 = vpack.c.b16 %v847, %v843
    %v1160 = vpack.c.b16 %v852, %v848
    %v1161 = vpack.c.b16 %v853, %v849
    %v1162 = vpack.c.b16 %v854, %v850
    %v1163 = vpack.c.b16 %v855, %v851
    %v1164 = vpack.c.b16 %v860, %v856
    %v1165 = vpack.c.b16 %v861, %v857
    %v1166 = vpack.c.b16 %v862, %v858
    %v1167 = vpack.c.b16 %v863, %v859
    %v1168 = vpack.c.b16 %v868, %v864
    %v1169 = vpack.c.b16 %v869, %v865
    %v1170 = vpack.c.b16 %v870, %v866
    %v1171 = vpack.c.b16 %v871, %v867
    %v1172 = vpack.c.b16 %v876, %v872
    %v1173 = vpack.c.b16 %v877, %v873
    %v1174 = vpack.c.b16 %v878, %v874
    %v1175 = vpack.c.b16 %v879, %v875
    %v1176 = vpack.c.b16 %v884, %v880
    %v1177 = vpack.c.b16 %v885, %v881
    %v1178 = vpack.c.b16 %v886, %v882
    %v1179 = vpack.c.b16 %v887, %v883
    %v1180 = vpack.c.b16 %v892, %v888
    %v1181 = vpack.c.b16 %v893, %v889
    %v1182 = vpack.c.b16 %v894, %v890
    %v1183 = vpack.c.b16 %v895, %v891
    %v1184 = vpack.c.b16 %v900, %v896
    %v1185 = vpack.c.b16 %v901, %v897
    %v1186 = vpack.c.b16 %v902, %v898
    %v1187 = vpack.c.b16 %v903, %v899
    %v1188 = vpack.c.b16 %v908, %v904
    %v1189 = vpack.c.b16 %v909, %v905
    %v1190 = vpack.c.b16 %v910, %v906
    %v1191 = vpack.c.b16 %v911, %v907
    %v1192 = vpack.c.b16 %v916, %v912
    %v1193 = vpack.c.b16 %v917, %v913
    %v1194 = vpack.c.b16 %v918, %v914
    %v1195 = vpack.c.b16 %v919, %v915
    %v1196 = vpack.c.b16 %v924, %v920
    %v1197 = vpack.c.b16 %v925, %v921
    %v1198 = vpack.c.b16 %v926, %v922
    %v1199 = vpack.c.b16 %v927, %v923
    %v1200 = vpack.c.b16 %v932, %v928
    %v1201 = vpack.c.b16 %v933, %v929
    %v1202 = vpack.c.b16 %v934, %v930
    %v1203 = vpack.c.b16 %v935, %v931
    %v1204 = vpack.c.b16 %v940, %v936
    %v1205 = vpack.c.b16 %v941, %v937
    %v1206 = vpack.c.b16 %v942, %v938
    %v1207 = vpack.c.b16 %v943, %v939
    %v1208 = vpack.c.b16 %v948, %v944
    %v1209 = vpack.c.b16 %v949, %v945
    %v1210 = vpack.c.b16 %v950, %v946
    %v1211 = vpack.c.b16 %v951, %v947
    %v1212 = vpack.c.b16 %v956, %v952
    %v1213 = vpack.c.b16 %v957, %v953
    %v1214 = vpack.c.b16 %v958, %v954
    %v1215 = vpack.c.b16 %v959, %v955
    %v1216 = vpack.c.b16 %v964, %v960
    %v1217 = vpack.c.b16 %v965, %v961
    %v1218 = vpack.c.b16 %v966, %v962
    %v1219 = vpack.c.b16 %v967, %v963
    %v1220 = vpack.c.b16 %v972, %v968
    %v1221 = vpack.c.b16 %v973, %v969
    %v1222 = vpack.c.b16 %v974, %v970
    %v1223 = vpack.c.b16 %v975, %v971
    %v1224 = vpack.c.b16 %v980, %v976
    %v1225 = vpack.c.b16 %v981, %v977
    %v1226 = vpack.c.b16 %v982, %v978
    %v1227 = vpack.c.b16 %v983, %v979
    %v1228 = vpack.c.b16 %v988, %v984
    %v1229 = vpack.c.b16 %v989, %v985
    %v1230 = vpack.c.b16 %v990, %v986
    %v1231 = vpack.c.b16 %v991, %v987
    %v1232 = vpack.c.b16 %v996, %v992
    %v1233 = vpack.c.b16 %v997, %v993
    %v1234 = vpack.c.b16 %v998, %v994
    %v1235 = vpack.c.b16 %v999, %v995
    %v1236 = vpack.c.b16 %v1004, %v1000
    %v1237 = vpack.c.b16 %v1005, %v1001
    %v1238 = vpack.c.b16 %v1006, %v1002
    %v1239 = vpack.c.b16 %v1007, %v1003
    %v1240 = vpack.c.b16 %v1012, %v1008
    %v1241 = vpack.c.b16 %v1013, %v1009
    %v1242 = vpack.c.b16 %v1014, %v1010
    %v1243 = vpack.c.b16 %v1015, %v1011
    %v1244 = vpack.c.b16 %v1020, %v1016
    %v1245 = vpack.c.b16 %v1021, %v1017
    %v1246 = vpack.c.b16 %v1022, %v1018
    %v1247 = vpack.c.b16 %v1023, %v1019
    %1472 = vmatprep.subr.bf16.mxu0 %v1053
    %1473 = vmatpush1.bf16.msra.mxu0 %v1052
    %1474 = vmatprep.subr.bf16.mxu0 %v1049
    %1475 = vmatpush1.bf16.msra.mxu0 %v1048
    %1476 = vmatprep.subr.bf16.mxu0 %v1045
    %1477 = vmatpush1.bf16.msra.mxu0 %v1044
    %1478 = vmatprep.subr.bf16.mxu0 %v1041
    %1479 = vmatpush1.bf16.msra.mxu0 %v1040
    %1480 = vmatprep.subr.bf16.mxu0 %v1037
    %1481 = vmatpush1.bf16.msra.mxu0 %v1036
    %1482 = vmatprep.subr.bf16.mxu0 %v1033
    %1483 = vmatpush1.bf16.msra.mxu0 %v1032
    %1484 = vmatprep.subr.bf16.mxu0 %v1029
    %1485 = vmatpush1.bf16.msra.mxu0 %v1028
    %1486 = vmatprep.subr.bf16.mxu0 %v1025
    %1487 = vmatpush1.bf16.msra.mxu0 %v1024
    %1488 = vmatprep.subr.bf16.mxu0 %v1085
    %1489 = vmatpush2.bf16.msra.mxu0 %v1084
    %1490 = vmatprep.subr.bf16.mxu0 %v1081
    %1491 = vmatpush2.bf16.msra.mxu0 %v1080
    %1492 = vmatprep.subr.bf16.mxu0 %v1077
    %1493 = vmatpush2.bf16.msra.mxu0 %v1076
    %1494 = vmatprep.subr.bf16.mxu0 %v1073
    %1495 = vmatpush2.bf16.msra.mxu0 %v1072
    %1496 = vmatprep.subr.bf16.mxu0 %v1069
    %1497 = vmatpush2.bf16.msra.mxu0 %v1068
    %1498 = vmatprep.subr.bf16.mxu0 %v1065
    %1499 = vmatpush2.bf16.msra.mxu0 %v1064
    %1500 = vmatprep.subr.bf16.mxu0 %v1061
    %1501 = vmatpush2.bf16.msra.mxu0 %v1060
    %1502 = vmatprep.subr.bf16.mxu0 %v1057
    %1503 = vmatpush2.bf16.msra.mxu0 %v1056
    %1504 = vmatprep.mubr.bf16.mxu0 %v339
    %1505 = vmatmul.mubr.bf16.gmra.mxu0 %v338
    %v1506 = vpop.f32.mrf.mxu0
    %v1507 = vadd.f32 %v299, %v1506
    %v1508 = vpop.f32.mrf.mxu0
    %v1509 = vadd.f32 %v303, %v1508
    %v1510 = vpop.f32.mrf.mxu0
    %v1511 = vadd.f32 %v299, %v1510
    %v1512 = vpop.f32.mrf.mxu0
    %v1513 = vadd.f32 %v303, %v1512
    %1514 = vdwg.mxu0
    %1515 = vmatprep.subr.bf16.mxu0 %v1117
    %1516 = vmatpush1.bf16.msra.mxu0 %v1116
    %1517 = vmatprep.subr.bf16.mxu0 %v1113
    %1518 = vmatpush1.bf16.msra.mxu0 %v1112
    %1519 = vmatprep.subr.bf16.mxu0 %v1109
    %1520 = vmatpush1.bf16.msra.mxu0 %v1108
    %1521 = vmatprep.subr.bf16.mxu0 %v1105
    %1522 = vmatpush1.bf16.msra.mxu0 %v1104
    %1523 = vmatprep.subr.bf16.mxu0 %v1101
    %1524 = vmatpush1.bf16.msra.mxu0 %v1100
    %1525 = vmatprep.subr.bf16.mxu0 %v1097
    %1526 = vmatpush1.bf16.msra.mxu0 %v1096
    %1527 = vmatprep.subr.bf16.mxu0 %v1093
    %1528 = vmatpush1.bf16.msra.mxu0 %v1092
    %1529 = vmatprep.subr.bf16.mxu0 %v1089
    %1530 = vmatpush1.bf16.msra.mxu0 %v1088
    %1531 = vmatprep.subr.bf16.mxu0 %v1149
    %1532 = vmatpush2.bf16.msra.mxu0 %v1148
    %1533 = vmatprep.subr.bf16.mxu0 %v1145
    %1534 = vmatpush2.bf16.msra.mxu0 %v1144
    %1535 = vmatprep.subr.bf16.mxu0 %v1141
    %1536 = vmatpush2.bf16.msra.mxu0 %v1140
    %1537 = vmatprep.subr.bf16.mxu0 %v1137
    %1538 = vmatpush2.bf16.msra.mxu0 %v1136
    %1539 = vmatprep.subr.bf16.mxu0 %v1133
    %1540 = vmatpush2.bf16.msra.mxu0 %v1132
    %1541 = vmatprep.subr.bf16.mxu0 %v1129
    %1542 = vmatpush2.bf16.msra.mxu0 %v1128
    %1543 = vmatprep.subr.bf16.mxu0 %v1125
    %1544 = vmatpush2.bf16.msra.mxu0 %v1124
    %1545 = vmatprep.subr.bf16.mxu0 %v1121
    %1546 = vmatpush2.bf16.msra.mxu0 %v1120
    %1547 = vmatprep.mubr.bf16.mxu0 %v341
    %1548 = vmatmul.mubr.bf16.gmra.mxu0 %v340
    %v1549 = vpop.f32.mrf.mxu0
    %v1550 = vadd.f32 %v1507, %v1549
    %v1551 = vpop.f32.mrf.mxu0
    %v1552 = vadd.f32 %v1509, %v1551
    %v1553 = vpop.f32.mrf.mxu0
    %v1554 = vadd.f32 %v1511, %v1553
    %v1555 = vpop.f32.mrf.mxu0
    %v1556 = vadd.f32 %v1513, %v1555
    %1557 = vdwg.mxu0
    %1558 = vmatprep.subr.bf16.mxu0 %v1181
    %1559 = vmatpush1.bf16.msra.mxu0 %v1180
    %1560 = vmatprep.subr.bf16.mxu0 %v1177
    %1561 = vmatpush1.bf16.msra.mxu0 %v1176
    %1562 = vmatprep.subr.bf16.mxu0 %v1173
    %1563 = vmatpush1.bf16.msra.mxu0 %v1172
    %1564 = vmatprep.subr.bf16.mxu0 %v1169
    %1565 = vmatpush1.bf16.msra.mxu0 %v1168
    %1566 = vmatprep.subr.bf16.mxu0 %v1165
    %1567 = vmatpush1.bf16.msra.mxu0 %v1164
    %1568 = vmatprep.subr.bf16.mxu0 %v1161
    %1569 = vmatpush1.bf16.msra.mxu0 %v1160
    %1570 = vmatprep.subr.bf16.mxu0 %v1157
    %1571 = vmatpush1.bf16.msra.mxu0 %v1156
    %1572 = vmatprep.subr.bf16.mxu0 %v1153
    %1573 = vmatpush1.bf16.msra.mxu0 %v1152
    %1574 = vmatprep.subr.bf16.mxu0 %v1213
    %1575 = vmatpush2.bf16.msra.mxu0 %v1212
    %1576 = vmatprep.subr.bf16.mxu0 %v1209
    %1577 = vmatpush2.bf16.msra.mxu0 %v1208
    %1578 = vmatprep.subr.bf16.mxu0 %v1205
    %1579 = vmatpush2.bf16.msra.mxu0 %v1204
    %1580 = vmatprep.subr.bf16.mxu0 %v1201
    %1581 = vmatpush2.bf16.msra.mxu0 %v1200
    %1582 = vmatprep.subr.bf16.mxu0 %v1197
    %1583 = vmatpush2.bf16.msra.mxu0 %v1196
    %1584 = vmatprep.subr.bf16.mxu0 %v1193
    %1585 = vmatpush2.bf16.msra.mxu0 %v1192
    %1586 = vmatprep.subr.bf16.mxu0 %v1189
    %1587 = vmatpush2.bf16.msra.mxu0 %v1188
    %1588 = vmatprep.subr.bf16.mxu0 %v1185
    %1589 = vmatpush2.bf16.msra.mxu0 %v1184
    %1590 = vmatprep.mubr.bf16.mxu0 %v343
    %1591 = vmatmul.mubr.bf16.gmra.mxu0 %v342
    %v1592 = vpop.f32.mrf.mxu0
    %v1593 = vadd.f32 %v1550, %v1592
    %v1594 = vpop.f32.mrf.mxu0
    %v1595 = vadd.f32 %v1552, %v1594
    %v1596 = vpop.f32.mrf.mxu0
    %v1597 = vadd.f32 %v1554, %v1596
    %v1598 = vpop.f32.mrf.mxu0
    %v1599 = vadd.f32 %v1556, %v1598
    %1600 = vdwg.mxu0
    %1601 = vmatprep.subr.bf16.mxu0 %v1245
    %1602 = vmatpush1.bf16.msra.mxu0 %v1244
    %1603 = vmatprep.subr.bf16.mxu0 %v1241
    %1604 = vmatpush1.bf16.msra.mxu0 %v1240
    %1605 = vmatprep.subr.bf16.mxu0 %v1237
    %1606 = vmatpush1.bf16.msra.mxu0 %v1236
    %1607 = vmatprep.subr.bf16.mxu0 %v1233
    %1608 = vmatpush1.bf16.msra.mxu0 %v1232
    %1609 = vmatprep.subr.bf16.mxu0 %v1229
    %1610 = vmatpush1.bf16.msra.mxu0 %v1228
    %1611 = vmatprep.subr.bf16.mxu0 %v1225
    %1612 = vmatpush1.bf16.msra.mxu0 %v1224
    %1613 = vmatprep.subr.bf16.mxu0 %v1221
    %1614 = vmatpush1.bf16.msra.mxu0 %v1220
    %1615 = vmatprep.subr.bf16.mxu0 %v1217
    %1616 = vmatpush1.bf16.msra.mxu0 %v1216
    %1617 = vmatprep.subr.bf16.mxu0 0
    %1618 = vmatpush2.bf16.msra.mxu0 0
    %1619 = vmatprep.subr.bf16.mxu0 0
    %1620 = vmatpush2.bf16.msra.mxu0 0
    %1621 = vmatprep.subr.bf16.mxu0 0
    %1622 = vmatpush2.bf16.msra.mxu0 0
    %1623 = vmatprep.subr.bf16.mxu0 0
    %1624 = vmatpush2.bf16.msra.mxu0 0
    %1625 = vmatprep.subr.bf16.mxu0 0
    %1626 = vmatpush2.bf16.msra.mxu0 0
    %1627 = vmatprep.subr.bf16.mxu0 0
    %1628 = vmatpush2.bf16.msra.mxu0 0
    %1629 = vmatprep.subr.bf16.mxu0 0
    %1630 = vmatpush2.bf16.msra.mxu0 0
    %1631 = vmatprep.subr.bf16.mxu0 0
    %1632 = vmatpush2.bf16.msra.mxu0 0
    %1633 = vmatprep.mubr.bf16.mxu0 0
    %1634 = vmatmul.mubr.bf16.gmra.mxu0 %v344
    %v1635 = vpop.f32.mrf.mxu0
    %v1636 = vadd.f32 %v1593, %v1635
    %v1637 = vpop.f32.mrf.mxu0
    %v1638 = vadd.f32 %v1595, %v1637
    %v1639 = vpop.f32.mrf.mxu0
    %v1640 = vadd.f32 %v1597, %v1639
    %v1641 = vpop.f32.mrf.mxu0
    %v1642 = vadd.f32 %v1599, %v1641
    %1643 = vdwg.mxu0
    %1644 = vmatprep.subr.bf16.mxu0 %v1055
    %1645 = vmatpush1.bf16.msra.mxu0 %v1054
    %1646 = vmatprep.subr.bf16.mxu0 %v1051
    %1647 = vmatpush1.bf16.msra.mxu0 %v1050
    %1648 = vmatprep.subr.bf16.mxu0 %v1047
    %1649 = vmatpush1.bf16.msra.mxu0 %v1046
    %1650 = vmatprep.subr.bf16.mxu0 %v1043
    %1651 = vmatpush1.bf16.msra.mxu0 %v1042
    %1652 = vmatprep.subr.bf16.mxu0 %v1039
    %1653 = vmatpush1.bf16.msra.mxu0 %v1038
    %1654 = vmatprep.subr.bf16.mxu0 %v1035
    %1655 = vmatpush1.bf16.msra.mxu0 %v1034
    %1656 = vmatprep.subr.bf16.mxu0 %v1031
    %1657 = vmatpush1.bf16.msra.mxu0 %v1030
    %1658 = vmatprep.subr.bf16.mxu0 %v1027
    %1659 = vmatpush1.bf16.msra.mxu0 %v1026
    %1660 = vmatprep.subr.bf16.mxu0 %v1087
    %1661 = vmatpush2.bf16.msra.mxu0 %v1086
    %1662 = vmatprep.subr.bf16.mxu0 %v1083
    %1663 = vmatpush2.bf16.msra.mxu0 %v1082
    %1664 = vmatprep.subr.bf16.mxu0 %v1079
    %1665 = vmatpush2.bf16.msra.mxu0 %v1078
    %1666 = vmatprep.subr.bf16.mxu0 %v1075
    %1667 = vmatpush2.bf16.msra.mxu0 %v1074
    %1668 = vmatprep.subr.bf16.mxu0 %v1071
    %1669 = vmatpush2.bf16.msra.mxu0 %v1070
    %1670 = vmatprep.subr.bf16.mxu0 %v1067
    %1671 = vmatpush2.bf16.msra.mxu0 %v1066
    %1672 = vmatprep.subr.bf16.mxu0 %v1063
    %1673 = vmatpush2.bf16.msra.mxu0 %v1062
    %1674 = vmatprep.subr.bf16.mxu0 %v1059
    %1675 = vmatpush2.bf16.msra.mxu0 %v1058
    %1676 = vmatprep.mubr.bf16.mxu0 %v339
    %1677 = vmatmul.mubr.bf16.gmra.mxu0 %v338
    %v1678 = vpop.f32.mrf.mxu0
    %v1679 = vadd.f32 %v307, %v1678
    %v1680 = vpop.f32.mrf.mxu0
    %v1681 = vadd.f32 %v311, %v1680
    %v1682 = vpop.f32.mrf.mxu0
    %v1683 = vadd.f32 %v307, %v1682
    %v1684 = vpop.f32.mrf.mxu0
    %v1685 = vadd.f32 %v311, %v1684
    %1686 = vdwg.mxu0
    %1687 = vmatprep.subr.bf16.mxu0 %v1119
    %1688 = vmatpush1.bf16.msra.mxu0 %v1118
    %1689 = vmatprep.subr.bf16.mxu0 %v1115
    %1690 = vmatpush1.bf16.msra.mxu0 %v1114
    %1691 = vmatprep.subr.bf16.mxu0 %v1111
    %1692 = vmatpush1.bf16.msra.mxu0 %v1110
    %1693 = vmatprep.subr.bf16.mxu0 %v1107
    %1694 = vmatpush1.bf16.msra.mxu0 %v1106
    %1695 = vmatprep.subr.bf16.mxu0 %v1103
    %1696 = vmatpush1.bf16.msra.mxu0 %v1102
    %1697 = vmatprep.subr.bf16.mxu0 %v1099
    %1698 = vmatpush1.bf16.msra.mxu0 %v1098
    %1699 = vmatprep.subr.bf16.mxu0 %v1095
    %1700 = vmatpush1.bf16.msra.mxu0 %v1094
    %1701 = vmatprep.subr.bf16.mxu0 %v1091
    %1702 = vmatpush1.bf16.msra.mxu0 %v1090
    %1703 = vmatprep.subr.bf16.mxu0 %v1151
    %1704 = vmatpush2.bf16.msra.mxu0 %v1150
    %1705 = vmatprep.subr.bf16.mxu0 %v1147
    %1706 = vmatpush2.bf16.msra.mxu0 %v1146
    %1707 = vmatprep.subr.bf16.mxu0 %v1143
    %1708 = vmatpush2.bf16.msra.mxu0 %v1142
    %1709 = vmatprep.subr.bf16.mxu0 %v1139
    %1710 = vmatpush2.bf16.msra.mxu0 %v1138
    %1711 = vmatprep.subr.bf16.mxu0 %v1135
    %1712 = vmatpush2.bf16.msra.mxu0 %v1134
    %1713 = vmatprep.subr.bf16.mxu0 %v1131
    %1714 = vmatpush2.bf16.msra.mxu0 %v1130
    %1715 = vmatprep.subr.bf16.mxu0 %v1127
    %1716 = vmatpush2.bf16.msra.mxu0 %v1126
    %1717 = vmatprep.subr.bf16.mxu0 %v1123
    %1718 = vmatpush2.bf16.msra.mxu0 %v1122
    %1719 = vmatprep.mubr.bf16.mxu0 %v341
    %1720 = vmatmul.mubr.bf16.gmra.mxu0 %v340
    %v1721 = vpop.f32.mrf.mxu0
    %v1722 = vadd.f32 %v1679, %v1721
    %v1723 = vpop.f32.mrf.mxu0
    %v1724 = vadd.f32 %v1681, %v1723
    %v1725 = vpop.f32.mrf.mxu0
    %v1726 = vadd.f32 %v1683, %v1725
    %v1727 = vpop.f32.mrf.mxu0
    %v1728 = vadd.f32 %v1685, %v1727
    %1729 = vdwg.mxu0
    %1730 = vmatprep.subr.bf16.mxu0 %v1183
    %1731 = vmatpush1.bf16.msra.mxu0 %v1182
    %1732 = vmatprep.subr.bf16.mxu0 %v1179
    %1733 = vmatpush1.bf16.msra.mxu0 %v1178
    %1734 = vmatprep.subr.bf16.mxu0 %v1175
    %1735 = vmatpush1.bf16.msra.mxu0 %v1174
    %1736 = vmatprep.subr.bf16.mxu0 %v1171
    %1737 = vmatpush1.bf16.msra.mxu0 %v1170
    %1738 = vmatprep.subr.bf16.mxu0 %v1167
    %1739 = vmatpush1.bf16.msra.mxu0 %v1166
    %1740 = vmatprep.subr.bf16.mxu0 %v1163
    %1741 = vmatpush1.bf16.msra.mxu0 %v1162
    %1742 = vmatprep.subr.bf16.mxu0 %v1159
    %1743 = vmatpush1.bf16.msra.mxu0 %v1158
    %1744 = vmatprep.subr.bf16.mxu0 %v1155
    %1745 = vmatpush1.bf16.msra.mxu0 %v1154
    %1746 = vmatprep.subr.bf16.mxu0 %v1215
    %1747 = vmatpush2.bf16.msra.mxu0 %v1214
    %1748 = vmatprep.subr.bf16.mxu0 %v1211
    %1749 = vmatpush2.bf16.msra.mxu0 %v1210
    %1750 = vmatprep.subr.bf16.mxu0 %v1207
    %1751 = vmatpush2.bf16.msra.mxu0 %v1206
    %1752 = vmatprep.subr.bf16.mxu0 %v1203
    %1753 = vmatpush2.bf16.msra.mxu0 %v1202
    %1754 = vmatprep.subr.bf16.mxu0 %v1199
    %1755 = vmatpush2.bf16.msra.mxu0 %v1198
    %1756 = vmatprep.subr.bf16.mxu0 %v1195
    %1757 = vmatpush2.bf16.msra.mxu0 %v1194
    %1758 = vmatprep.subr.bf16.mxu0 %v1191
    %1759 = vmatpush2.bf16.msra.mxu0 %v1190
    %1760 = vmatprep.subr.bf16.mxu0 %v1187
    %1761 = vmatpush2.bf16.msra.mxu0 %v1186
    %1762 = vmatprep.mubr.bf16.mxu0 %v343
    %1763 = vmatmul.mubr.bf16.gmra.mxu0 %v342
    %v1764 = vpop.f32.mrf.mxu0
    %v1765 = vadd.f32 %v1722, %v1764
    %v1766 = vpop.f32.mrf.mxu0
    %v1767 = vadd.f32 %v1724, %v1766
    %v1768 = vpop.f32.mrf.mxu0
    %v1769 = vadd.f32 %v1726, %v1768
    %v1770 = vpop.f32.mrf.mxu0
    %v1771 = vadd.f32 %v1728, %v1770
    %1772 = vdwg.mxu0
    %1773 = vmatprep.subr.bf16.mxu0 %v1247
    %1774 = vmatpush1.bf16.msra.mxu0 %v1246
    %1775 = vmatprep.subr.bf16.mxu0 %v1243
    %1776 = vmatpush1.bf16.msra.mxu0 %v1242
    %1777 = vmatprep.subr.bf16.mxu0 %v1239
    %1778 = vmatpush1.bf16.msra.mxu0 %v1238
    %1779 = vmatprep.subr.bf16.mxu0 %v1235
    %1780 = vmatpush1.bf16.msra.mxu0 %v1234
    %1781 = vmatprep.subr.bf16.mxu0 %v1231
    %1782 = vmatpush1.bf16.msra.mxu0 %v1230
    %1783 = vmatprep.subr.bf16.mxu0 %v1227
    %1784 = vmatpush1.bf16.msra.mxu0 %v1226
    %1785 = vmatprep.subr.bf16.mxu0 %v1223
    %1786 = vmatpush1.bf16.msra.mxu0 %v1222
    %1787 = vmatprep.subr.bf16.mxu0 %v1219
    %1788 = vmatpush1.bf16.msra.mxu0 %v1218
    %1789 = vmatprep.subr.bf16.mxu0 0
    %1790 = vmatpush2.bf16.msra.mxu0 0
    %1791 = vmatprep.subr.bf16.mxu0 0
    %1792 = vmatpush2.bf16.msra.mxu0 0
    %1793 = vmatprep.subr.bf16.mxu0 0
    %1794 = vmatpush2.bf16.msra.mxu0 0
    %1795 = vmatprep.subr.bf16.mxu0 0
    %1796 = vmatpush2.bf16.msra.mxu0 0
    %1797 = vmatprep.subr.bf16.mxu0 0
    %1798 = vmatpush2.bf16.msra.mxu0 0
    %1799 = vmatprep.subr.bf16.mxu0 0
    %1800 = vmatpush2.bf16.msra.mxu0 0
    %1801 = vmatprep.subr.bf16.mxu0 0
    %1802 = vmatpush2.bf16.msra.mxu0 0
    %1803 = vmatprep.subr.bf16.mxu0 0
    %1804 = vmatpush2.bf16.msra.mxu0 0
    %1805 = vmatprep.mubr.bf16.mxu0 0
    %1806 = vmatmul.mubr.bf16.gmra.mxu0 %v344
    %v1807 = vpop.f32.mrf.mxu0
    %v1808 = vadd.f32 %v1765, %v1807
    %v1809 = vpop.f32.mrf.mxu0
    %v1810 = vadd.f32 %v1767, %v1809
    %v1811 = vpop.f32.mrf.mxu0
    %v1812 = vadd.f32 %v1769, %v1811
    %v1813 = vpop.f32.mrf.mxu0
    %v1814 = vadd.f32 %v1771, %v1813
    %1815 = vdwg.mxu0
    %v1816 = vmax.f32 %v1636, 0.0
    %v1817 = vmax.f32 %v1638, 0.0
    %v1818 = vmax.f32 %v1808, 0.0
    %v1819 = vmax.f32 %v1810, 0.0
    %v1820 = vmax.f32 %v1640, 0.0
    %v1821 = vmax.f32 %v1642, 0.0
    %v1822 = vmax.f32 %v1812, 0.0
    %v1823 = vmax.f32 %v1814, 0.0
    %v1824 = vpack.c.bf16 %v1820, %v1816
    %v1825 = vpack.c.bf16 %v1821, %v1817
    %v1826 = vpack.c.bf16 %v1822, %v1818
    %v1827 = vpack.c.bf16 %v1823, %v1819
    %v1828 = vld [vmem:[#allocation5] sm:$0xf]
    %v1829 = vld [vmem:[#allocation5 + $0x4] sm:$0xf]
    %v1830 = vld [vmem:[#allocation5 + $0x8] sm:$0xf]
    %v1831 = vld [vmem:[#allocation5 + $0xc] sm:$0xf]
    %v1832 = vld [vmem:[#allocation5 + $0x10] sm:$0xf]
    %v1833 = vld [vmem:[#allocation5 + $0x14] sm:$0xf]
    %v1834 = vld [vmem:[#allocation5 + $0x18] sm:$0xf]
    %v1835 = vld [vmem:[#allocation5 + $0x1c] sm:$0xf]
    %v1836 = vld [vmem:[#allocation5 + $0x20] sm:$0xf]
    %v1837 = vld [vmem:[#allocation5 + $0x24] sm:$0xf]
    %v1838 = vld [vmem:[#allocation5 + $0x28] sm:$0xf]
    %v1839 = vld [vmem:[#allocation5 + $0x2c] sm:$0xf]
    %v1840 = vld [vmem:[#allocation5 + $0x30] sm:$0xf]
    %v1841 = vld [vmem:[#allocation5 + $0x34] sm:$0xf]
    %v1842 = vld [vmem:[#allocation5 + $0x38] sm:$0xf]
    %v1843 = vld [vmem:[#allocation5 + $0x3c] sm:$0xf]
    %v1844 = vld [vmem:[#allocation5 + $0x40] sm:$0xf]
    %v1845 = vld [vmem:[#allocation5 + $0x44] sm:$0xf]
    %v1846 = vld [vmem:[#allocation5 + $0x48] sm:$0xf]
    %v1847 = vld [vmem:[#allocation5 + $0x4c] sm:$0xf]
    %v1848 = vld [vmem:[#allocation5 + $0x50] sm:$0xf]
    %v1849 = vld [vmem:[#allocation5 + $0x54] sm:$0xf]
    %v1850 = vld [vmem:[#allocation5 + $0x58] sm:$0xf]
    %v1851 = vld [vmem:[#allocation5 + $0x5c] sm:$0xf]
    %v1852 = vld [vmem:[#allocation5 + $0x60] sm:$0xf]
    %v1853 = vld [vmem:[#allocation5 + $0x64] sm:$0xf]
    %v1854 = vld [vmem:[#allocation5 + $0x68] sm:$0xf]
    %v1855 = vld [vmem:[#allocation5 + $0x6c] sm:$0xf]
    %v1856 = vld [vmem:[#allocation5 + $0x70] sm:$0xf]
    %v1857 = vld [vmem:[#allocation5 + $0x74] sm:$0xf]
    %v1858 = vld [vmem:[#allocation5 + $0x78] sm:$0xf]
    %v1859 = vld [vmem:[#allocation5 + $0x7c] sm:$0xf]
    %v1860 = vld [vmem:[#allocation5 + $0x80] sm:$0xf]
    %v1861 = vld [vmem:[#allocation5 + $0x84] sm:$0xf]
    %v1862 = vld [vmem:[#allocation5 + $0x88] sm:$0xf]
    %v1863 = vld [vmem:[#allocation5 + $0x8c] sm:$0xf]
    %v1864 = vld [vmem:[#allocation5 + $0x90] sm:$0xf]
    %v1865 = vld [vmem:[#allocation5 + $0x94] sm:$0xf]
    %v1866 = vld [vmem:[#allocation5 + $0x98] sm:$0xf]
    %v1867 = vld [vmem:[#allocation5 + $0x9c] sm:$0xf]
    %v1868 = vld [vmem:[#allocation5 + $0xa0] sm:$0xf]
    %v1869 = vld [vmem:[#allocation5 + $0xa4] sm:$0xf]
    %v1870 = vld [vmem:[#allocation5 + $0xa8] sm:$0xf]
    %v1871 = vld [vmem:[#allocation5 + $0xac] sm:$0xf]
    %v1872 = vld [vmem:[#allocation5 + $0xb0] sm:$0xf]
    %v1873 = vld [vmem:[#allocation5 + $0xb4] sm:$0xf]
    %v1874 = vld [vmem:[#allocation5 + $0xb8] sm:$0xf]
    %v1875 = vld [vmem:[#allocation5 + $0xbc] sm:$0xf]
    %v1876 = vld [vmem:[#allocation5 + $0xc0] sm:$0xf]
    %v1877 = vld [vmem:[#allocation5 + $0xc4] sm:$0xf]
    %v1878 = vld [vmem:[#allocation5 + $0xc8] sm:$0xf]
    %v1879 = vld [vmem:[#allocation5 + $0xcc] sm:$0xf]
    %v1880 = vld [vmem:[#allocation5 + $0xd0] sm:$0xf]
    %v1881 = vld [vmem:[#allocation5 + $0xd4] sm:$0xf]
    %v1882 = vld [vmem:[#allocation5 + $0xd8] sm:$0xf]
    %v1883 = vld [vmem:[#allocation5 + $0xdc] sm:$0xf]
    %v1884 = vld [vmem:[#allocation5 + $0xe0] sm:$0xf]
    %v1885 = vld [vmem:[#allocation5 + $0xe4] sm:$0xf]
    %v1886 = vld [vmem:[#allocation5 + $0xe8] sm:$0xf]
    %v1887 = vld [vmem:[#allocation5 + $0xec] sm:$0xf]
    %v1888 = vld [vmem:[#allocation5 + $0xf0] sm:$0xf]
    %v1889 = vld [vmem:[#allocation5 + $0xf4] sm:$0xf]
    %v1890 = vld [vmem:[#allocation5 + $0xf8] sm:$0xf]
    %v1891 = vld [vmem:[#allocation5 + $0xfc] sm:$0xf]
    %v1892 = vld [vmem:[%s4] sm:$0x1]
    %v1894 = vlaneseq
    %v1895 = vshrl.u32 %v1894, 7
    %v1896 = vsub.s32 0, %v1895
    %v1897 = vrot.slane %v1892, %v1896
    %v1963 = vunpack.c.l.b16 %v1828
    %v1964 = vunpack.c.l.b16 %v1829
    %v1965 = vunpack.c.l.b16 %v1830
    %v1966 = vunpack.c.l.b16 %v1831
    %v1967 = vunpack.c.l.b16 %v1832
    %v1968 = vunpack.c.l.b16 %v1833
    %v1969 = vunpack.c.l.b16 %v1834
    %v1970 = vunpack.c.l.b16 %v1835
    %v1971 = vunpack.c.l.b16 %v1836
    %v1972 = vunpack.c.l.b16 %v1837
    %v1973 = vunpack.c.l.b16 %v1838
    %v1974 = vunpack.c.l.b16 %v1839
    %v1975 = vunpack.c.l.b16 %v1840
    %v1976 = vunpack.c.l.b16 %v1841
    %v1977 = vunpack.c.l.b16 %v1842
    %v1978 = vunpack.c.l.b16 %v1843
    %v1979 = vunpack.c.l.b16 %v1844
    %v1980 = vunpack.c.l.b16 %v1845
    %v1981 = vunpack.c.l.b16 %v1846
    %v1982 = vunpack.c.l.b16 %v1847
    %v1983 = vunpack.c.l.b16 %v1848
    %v1984 = vunpack.c.l.b16 %v1849
    %v1985 = vunpack.c.l.b16 %v1850
    %v1986 = vunpack.c.l.b16 %v1851
    %v1987 = vunpack.c.l.b16 %v1852
    %v1988 = vunpack.c.l.b16 %v1853
    %v1989 = vunpack.c.l.b16 %v1854
    %v1990 = vunpack.c.l.b16 %v1855
    %v1991 = vunpack.c.l.b16 %v1856
    %v1992 = vunpack.c.l.b16 %v1857
    %v1993 = vunpack.c.l.b16 %v1858
    %v1994 = vunpack.c.l.b16 %v1859
    %v1995 = vunpack.c.l.b16 %v1860
    %v1996 = vunpack.c.l.b16 %v1861
    %v1997 = vunpack.c.l.b16 %v1862
    %v1998 = vunpack.c.l.b16 %v1863
    %v1999 = vunpack.c.l.b16 %v1864
    %v2000 = vunpack.c.l.b16 %v1865
    %v2001 = vunpack.c.l.b16 %v1866
    %v2002 = vunpack.c.l.b16 %v1867
    %v2003 = vunpack.c.l.b16 %v1868
    %v2004 = vunpack.c.l.b16 %v1869
    %v2005 = vunpack.c.l.b16 %v1870
    %v2006 = vunpack.c.l.b16 %v1871
    %v2007 = vunpack.c.l.b16 %v1872
    %v2008 = vunpack.c.l.b16 %v1873
    %v2009 = vunpack.c.l.b16 %v1874
    %v2010 = vunpack.c.l.b16 %v1875
    %v2011 = vunpack.c.l.b16 %v1876
    %v2012 = vunpack.c.l.b16 %v1877
    %v2013 = vunpack.c.l.b16 %v1878
    %v2014 = vunpack.c.l.b16 %v1879
    %v2015 = vunpack.c.l.b16 %v1880
    %v2016 = vunpack.c.l.b16 %v1881
    %v2017 = vunpack.c.l.b16 %v1882
    %v2018 = vunpack.c.l.b16 %v1883
    %v2019 = vunpack.c.l.b16 %v1884
    %v2020 = vunpack.c.l.b16 %v1885
    %v2021 = vunpack.c.l.b16 %v1886
    %v2022 = vunpack.c.l.b16 %v1887
    %v2023 = vunpack.c.l.b16 %v1888
    %v2024 = vunpack.c.l.b16 %v1889
    %v2025 = vunpack.c.l.b16 %v1890
    %v2026 = vunpack.c.l.b16 %v1891
    %v2027 = vpack.c.b16 %v1964, %v1963
    %v2028 = vpack.c.b16 %v1966, %v1965
    %v2029 = vpack.c.b16 %v1968, %v1967
    %v2030 = vpack.c.b16 %v1970, %v1969
    %v2031 = vpack.c.b16 %v1972, %v1971
    %v2032 = vpack.c.b16 %v1974, %v1973
    %v2033 = vpack.c.b16 %v1976, %v1975
    %v2034 = vpack.c.b16 %v1978, %v1977
    %v2035 = vpack.c.b16 %v1980, %v1979
    %v2036 = vpack.c.b16 %v1982, %v1981
    %v2037 = vpack.c.b16 %v1984, %v1983
    %v2038 = vpack.c.b16 %v1986, %v1985
    %v2039 = vpack.c.b16 %v1988, %v1987
    %v2040 = vpack.c.b16 %v1990, %v1989
    %v2041 = vpack.c.b16 %v1992, %v1991
    %v2042 = vpack.c.b16 %v1994, %v1993
    %v2043 = vpack.c.b16 %v1996, %v1995
    %v2044 = vpack.c.b16 %v1998, %v1997
    %v2045 = vpack.c.b16 %v2000, %v1999
    %v2046 = vpack.c.b16 %v2002, %v2001
    %v2047 = vpack.c.b16 %v2004, %v2003
    %v2048 = vpack.c.b16 %v2006, %v2005
    %v2049 = vpack.c.b16 %v2008, %v2007
    %v2050 = vpack.c.b16 %v2010, %v2009
    %v2051 = vpack.c.b16 %v2012, %v2011
    %v2052 = vpack.c.b16 %v2014, %v2013
    %v2053 = vpack.c.b16 %v2016, %v2015
    %v2054 = vpack.c.b16 %v2018, %v2017
    %v2055 = vpack.c.b16 %v2020, %v2019
    %v2056 = vpack.c.b16 %v2022, %v2021
    %v2057 = vpack.c.b16 %v2024, %v2023
    %v2058 = vpack.c.b16 %v2026, %v2025
    %2091 = vmatprep.subr.bf16.mxu0 0
    %2092 = vmatpush1.bf16.msra.mxu0 %v2034
    %2093 = vmatprep.subr.bf16.mxu0 0
    %2094 = vmatpush1.bf16.msra.mxu0 %v2033
    %2095 = vmatprep.subr.bf16.mxu0 0
    %2096 = vmatpush1.bf16.msra.mxu0 %v2032
    %2097 = vmatprep.subr.bf16.mxu0 0
    %2098 = vmatpush1.bf16.msra.mxu0 %v2031
    %2099 = vmatprep.subr.bf16.mxu0 0
    %2100 = vmatpush1.bf16.msra.mxu0 %v2030
    %2101 = vmatprep.subr.bf16.mxu0 0
    %2102 = vmatpush1.bf16.msra.mxu0 %v2029
    %2103 = vmatprep.subr.bf16.mxu0 0
    %2104 = vmatpush1.bf16.msra.mxu0 %v2028
    %2105 = vmatprep.subr.bf16.mxu0 0
    %2106 = vmatpush1.bf16.msra.mxu0 %v2027
    %2107 = vmatprep.subr.bf16.mxu0 0
    %2108 = vmatpush2.bf16.msra.mxu0 %v2042
    %2109 = vmatprep.subr.bf16.mxu0 0
    %2110 = vmatpush2.bf16.msra.mxu0 %v2041
    %2111 = vmatprep.subr.bf16.mxu0 0
    %2112 = vmatpush2.bf16.msra.mxu0 %v2040
    %2113 = vmatprep.subr.bf16.mxu0 0
    %2114 = vmatpush2.bf16.msra.mxu0 %v2039
    %2115 = vmatprep.subr.bf16.mxu0 0
    %2116 = vmatpush2.bf16.msra.mxu0 %v2038
    %2117 = vmatprep.subr.bf16.mxu0 0
    %2118 = vmatpush2.bf16.msra.mxu0 %v2037
    %2119 = vmatprep.subr.bf16.mxu0 0
    %2120 = vmatpush2.bf16.msra.mxu0 %v2036
    %2121 = vmatprep.subr.bf16.mxu0 0
    %2122 = vmatpush2.bf16.msra.mxu0 %v2035
    %2123 = vmatprep.mubr.bf16.mxu0 %v1825
    %2124 = vmatmul.mubr.bf16.gmra.mxu0 %v1824
    %v2125 = vpop.f32.mrf.mxu0
    %v2126 = vadd.f32 %v1897, %v2125
    %v2127 = vpop.f32.mrf.mxu0
    %v2128 = vpop.f32.mrf.mxu0
    %v2129 = vadd.f32 %v1897, %v2128
    %v2130 = vpop.f32.mrf.mxu0
    %2131 = vdwg.mxu0
    %2132 = vmatprep.subr.bf16.mxu0 0
    %2133 = vmatpush1.bf16.msra.mxu0 %v2050
    %2134 = vmatprep.subr.bf16.mxu0 0
    %2135 = vmatpush1.bf16.msra.mxu0 %v2049
    %2136 = vmatprep.subr.bf16.mxu0 0
    %2137 = vmatpush1.bf16.msra.mxu0 %v2048
    %2138 = vmatprep.subr.bf16.mxu0 0
    %2139 = vmatpush1.bf16.msra.mxu0 %v2047
    %2140 = vmatprep.subr.bf16.mxu0 0
    %2141 = vmatpush1.bf16.msra.mxu0 %v2046
    %2142 = vmatprep.subr.bf16.mxu0 0
    %2143 = vmatpush1.bf16.msra.mxu0 %v2045
    %2144 = vmatprep.subr.bf16.mxu0 0
    %2145 = vmatpush1.bf16.msra.mxu0 %v2044
    %2146 = vmatprep.subr.bf16.mxu0 0
    %2147 = vmatpush1.bf16.msra.mxu0 %v2043
    %2148 = vmatprep.subr.bf16.mxu0 0
    %2149 = vmatpush2.bf16.msra.mxu0 %v2058
    %2150 = vmatprep.subr.bf16.mxu0 0
    %2151 = vmatpush2.bf16.msra.mxu0 %v2057
    %2152 = vmatprep.subr.bf16.mxu0 0
    %2153 = vmatpush2.bf16.msra.mxu0 %v2056
    %2154 = vmatprep.subr.bf16.mxu0 0
    %2155 = vmatpush2.bf16.msra.mxu0 %v2055
    %2156 = vmatprep.subr.bf16.mxu0 0
    %2157 = vmatpush2.bf16.msra.mxu0 %v2054
    %2158 = vmatprep.subr.bf16.mxu0 0
    %2159 = vmatpush2.bf16.msra.mxu0 %v2053
    %2160 = vmatprep.subr.bf16.mxu0 0
    %2161 = vmatpush2.bf16.msra.mxu0 %v2052
    %2162 = vmatprep.subr.bf16.mxu0 0
    %2163 = vmatpush2.bf16.msra.mxu0 %v2051
    %2164 = vmatprep.mubr.bf16.mxu0 %v1827
    %2165 = vmatmul.mubr.bf16.gmra.mxu0 %v1826
    %v2166 = vpop.f32.mrf.mxu0
    %v2167 = vadd.f32 %v2126, %v2166
    %v2168 = vpop.f32.mrf.mxu0
    %v2169 = vpop.f32.mrf.mxu0
    %v2170 = vadd.f32 %v2129, %v2169
    %v2171 = vpop.f32.mrf.mxu0
    %2172 = vdwg.mxu0
    %v2173 = vmax.f32 %v2167, 0.0
    %v2174 = vmax.f32 %v2170, 0.0
    %v2175 = vpack.c.bf16 %v2174, %v2173
    %v2176 = vld [vmem:[%s5] sm:$0xf]
    %v2177 = vld [vmem:[%s5 + $0x4] sm:$0xf]
    %v2178 = vld [vmem:[%s5 + $0x8] sm:$0xf]
    %v2179 = vld [vmem:[%s5 + $0xc] sm:$0xf]
    %v2180 = vld [vmem:[%s5 + $0x10] sm:$0xf]
    %v2181 = vld [vmem:[%s5 + $0x14] sm:$0xf]
    %v2182 = vld [vmem:[%s5 + $0x18] sm:$0xf]
    %v2183 = vld [vmem:[%s5 + $0x1c] sm:$0xf]
    %v2184 = vld [vmem:[%s5 + $0x20] sm:$0xf]
    %v2185 = vld [vmem:[%s5 + $0x24] sm:$0xf]
    %v2186 = vld [vmem:[%s5 + $0x28] sm:$0xf]
    %v2187 = vld [vmem:[%s5 + $0x2c] sm:$0xf]
    %v2188 = vld [vmem:[%s5 + $0x30] sm:$0xf]
    %v2189 = vld [vmem:[%s5 + $0x34] sm:$0xf]
    %v2190 = vld [vmem:[%s5 + $0x38] sm:$0xf]
    %v2191 = vld [vmem:[%s5 + $0x3c] sm:$0xf]
    %v2192 = vld [vmem:[%s6] sm:$0x1]
    %v2194 = vlaneseq
    %v2195 = vshrl.u32 %v2194, 7
    %v2196 = vsub.s32 0, %v2195
    %v2197 = vrot.slane %v2192, %v2196
    %v2215 = vunpack.c.l.b16 %v2176
    %v2216 = vunpack.c.l.b16 %v2177
    %v2217 = vunpack.c.l.b16 %v2178
    %v2218 = vunpack.c.l.b16 %v2179
    %v2219 = vunpack.c.l.b16 %v2180
    %v2220 = vunpack.c.l.b16 %v2181
    %v2221 = vunpack.c.l.b16 %v2182
    %v2222 = vunpack.c.l.b16 %v2183
    %v2223 = vunpack.c.l.b16 %v2184
    %v2224 = vunpack.c.l.b16 %v2185
    %v2225 = vunpack.c.l.b16 %v2186
    %v2226 = vunpack.c.l.b16 %v2187
    %v2227 = vunpack.c.l.b16 %v2188
    %v2228 = vunpack.c.l.b16 %v2189
    %v2229 = vunpack.c.l.b16 %v2190
    %v2230 = vunpack.c.l.b16 %v2191
    %v2231 = vpack.c.b16 %v2216, %v2215
    %v2232 = vpack.c.b16 %v2218, %v2217
    %v2233 = vpack.c.b16 %v2220, %v2219
    %v2234 = vpack.c.b16 %v2222, %v2221
    %v2235 = vpack.c.b16 %v2224, %v2223
    %v2236 = vpack.c.b16 %v2226, %v2225
    %v2237 = vpack.c.b16 %v2228, %v2227
    %v2238 = vpack.c.b16 %v2230, %v2229
    %2247 = vmatprep.subr.bf16.mxu0 0
    %2248 = vmatpush1.bf16.msra.mxu0 %v2238
    %2249 = vmatprep.subr.bf16.mxu0 0
    %2250 = vmatpush1.bf16.msra.mxu0 %v2237
    %2251 = vmatprep.subr.bf16.mxu0 0
    %2252 = vmatpush1.bf16.msra.mxu0 %v2236
    %2253 = vmatprep.subr.bf16.mxu0 0
    %2254 = vmatpush1.bf16.msra.mxu0 %v2235
    %2255 = vmatprep.subr.bf16.mxu0 0
    %2256 = vmatpush1.bf16.msra.mxu0 %v2234
    %2257 = vmatprep.subr.bf16.mxu0 0
    %2258 = vmatpush1.bf16.msra.mxu0 %v2233
    %2259 = vmatprep.subr.bf16.mxu0 0
    %2260 = vmatpush1.bf16.msra.mxu0 %v2232
    %2261 = vmatprep.subr.bf16.mxu0 0
    %2262 = vmatpush1.bf16.msra.mxu0 %v2231
    %2263 = vmatprep.subr.bf16.mxu0 0
    %2264 = vmatpush2.bf16.msra.mxu0 0
    %2265 = vmatprep.subr.bf16.mxu0 0
    %2266 = vmatpush2.bf16.msra.mxu0 0
    %2267 = vmatprep.subr.bf16.mxu0 0
    %2268 = vmatpush2.bf16.msra.mxu0 0
    %2269 = vmatprep.subr.bf16.mxu0 0
    %2270 = vmatpush2.bf16.msra.mxu0 0
    %2271 = vmatprep.subr.bf16.mxu0 0
    %2272 = vmatpush2.bf16.msra.mxu0 0
    %2273 = vmatprep.subr.bf16.mxu0 0
    %2274 = vmatpush2.bf16.msra.mxu0 0
    %2275 = vmatprep.subr.bf16.mxu0 0
    %2276 = vmatpush2.bf16.msra.mxu0 0
    %2277 = vmatprep.subr.bf16.mxu0 0
    %2278 = vmatpush2.bf16.msra.mxu0 0
    %2279 = vmatprep.mubr.bf16.mxu0 0
    %2280 = vmatmul.mubr.bf16.gmra.mxu0 %v2175
    %v2281 = vpop.f32.mrf.mxu0
    %v2282 = vadd.f32 %v2197, %v2281
    %v2283 = vpop.f32.mrf.mxu0
    %v2284 = vpop.f32.mrf.mxu0
    %v2285 = vadd.f32 %v2197, %v2284
    %v2286 = vpop.f32.mrf.mxu0
    %2287 = vdwg.mxu0
    %v2288 = vmax.f32 %v2282, 0.0
    %v2289 = vmax.f32 %v2285, 0.0
    %v2290 = vpack.c.bf16 %v2289, %v2288
    %v2291 = vld [vmem:[%s7] sm:$0xf]
    %v2292 = vld [vmem:[%s7 + $0x4] sm:$0xf]
    %v2293 = vld [vmem:[%s7 + $0x8] sm:$0xf]
    %v2294 = vld [vmem:[%s7 + $0xc] sm:$0xf]
    %v2295 = vld [vmem:[%s7 + $0x10] sm:$0xf]
    %v2296 = vld [vmem:[%s7 + $0x14] sm:$0xf]
    %v2297 = vld [vmem:[%s7 + $0x18] sm:$0xf]
    %v2298 = vld [vmem:[%s7 + $0x1c] sm:$0xf]
    %v2299 = vld [vmem:[%s8] sm:$0x1]
    %v2301 = vlaneseq
    %v2302 = vshrl.u32 %v2301, 7
    %v2303 = vsub.s32 0, %v2302
    %v2304 = vrot.slane %v2299, %v2303
    %v2314 = vunpack.c.l.b16 %v2291
    %v2315 = vunpack.c.l.b16 %v2292
    %v2316 = vunpack.c.l.b16 %v2293
    %v2317 = vunpack.c.l.b16 %v2294
    %v2318 = vunpack.c.l.b16 %v2295
    %v2319 = vunpack.c.l.b16 %v2296
    %v2320 = vunpack.c.l.b16 %v2297
    %v2321 = vunpack.c.l.b16 %v2298
    %v2322 = vpack.c.b16 %v2315, %v2314
    %v2323 = vpack.c.b16 %v2317, %v2316
    %v2324 = vpack.c.b16 %v2319, %v2318
    %v2325 = vpack.c.b16 %v2321, %v2320
    %vm2330 = vcmask 523264
    %v2332 = vsel %vm2330, %v2290, 0
    %2334 = vmatprep.subr.bf16.mxu0 0
    %2335 = vmatpush1.bf16.msra.mxu0 0
    %2336 = vmatprep.subr.bf16.mxu0 0
    %2337 = vmatpush1.bf16.msra.mxu0 0
    %2338 = vmatprep.subr.bf16.mxu0 0
    %2339 = vmatpush1.bf16.msra.mxu0 0
    %2340 = vmatprep.subr.bf16.mxu0 0
    %2341 = vmatpush1.bf16.msra.mxu0 0
    %2342 = vmatprep.subr.bf16.mxu0 0
    %2343 = vmatpush1.bf16.msra.mxu0 %v2325
    %2344 = vmatprep.subr.bf16.mxu0 0
    %2345 = vmatpush1.bf16.msra.mxu0 %v2324
    %2346 = vmatprep.subr.bf16.mxu0 0
    %2347 = vmatpush1.bf16.msra.mxu0 %v2323
    %2348 = vmatprep.subr.bf16.mxu0 0
    %2349 = vmatpush1.bf16.msra.mxu0 %v2322
    %2350 = vmatprep.subr.bf16.mxu0 0
    %2351 = vmatpush2.bf16.msra.mxu0 0
    %2352 = vmatprep.subr.bf16.mxu0 0
    %2353 = vmatpush2.bf16.msra.mxu0 0
    %2354 = vmatprep.subr.bf16.mxu0 0
    %2355 = vmatpush2.bf16.msra.mxu0 0
    %2356 = vmatprep.subr.bf16.mxu0 0
    %2357 = vmatpush2.bf16.msra.mxu0 0
    %2358 = vmatprep.subr.bf16.mxu0 0
    %2359 = vmatpush2.bf16.msra.mxu0 0
    %2360 = vmatprep.subr.bf16.mxu0 0
    %2361 = vmatpush2.bf16.msra.mxu0 0
    %2362 = vmatprep.subr.bf16.mxu0 0
    %2363 = vmatpush2.bf16.msra.mxu0 0
    %2364 = vmatprep.subr.bf16.mxu0 0
    %2365 = vmatpush2.bf16.msra.mxu0 0
    %2366 = vmatprep.mubr.bf16.mxu0 0
    %2367 = vmatmul.mubr.bf16.gmra.mxu0 %v2332
    %v2368 = vpop.f32.mrf.mxu0
    %v2369 = vadd.f32 %v2304, %v2368
    %v2370 = vpop.f32.mrf.mxu0
    %v2371 = vpop.f32.mrf.mxu0
    %v2372 = vadd.f32 %v2304, %v2371
    %v2373 = vpop.f32.mrf.mxu0
    %2374 = vdwg.mxu0
    %2375 = vst [vmem:[#allocation7] sm:$0xff] %v2369
    %2376 = vst [vmem:[#allocation7 + $0x8] sm:$0xff] %v2372
    // Predicated region
    $region46: #{tpu_custom_call.1} parent=1 // pred_check
      _
    $region47: #{tpu_custom_call.1} parent=1 // pred_check_branch
      %2378 = sbr.rel (0) target = $region49
    $region48: #{tpu_custom_call.1} parent=1 // pred_region
      %s2380 = ssub.s32 256, 256
      %2381 = vsyncadd [#allocation4], %s2380
      %s2382 = sshll.u32 [#allocation7], 4
      %s2383 = int_to_ptr.vmem [resolvable:$true] %s2382
      %2388 = dma.vmem_to_hbm [thread:$0]  %s2383, 256, %s9, [#allocation4], 128, 128, 8
    $region49: #{tpu_custom_call.1} parent=1 // pred_fallthru
      _
    // Predicated region
    $region50: #{tpu_custom_call.1} parent=1 // pred_check
      _
    $region51: #{tpu_custom_call.1} parent=1 // pred_check_branch
      %2390 = sbr.rel (0) target = $region53
    $region52: #{tpu_custom_call.1} parent=1 // pred_region
      %2391 = dma.done [#allocation4], 256
    $region53: #{tpu_custom_call.1} parent=1 // pred_fallthru
      _
    %2392 = vsyncpa [#allocation3], 1
    %2393 = vsyncpa [#allocation6], 1
    %2394 = vsyncpa [#allocation4], 1

</llo_original>
